<compile_context>
chip_gen: v5e
topology: v5e:2x2
jax: 0.10.0
libtpu: 0.0.40
codegen_flags: <defaults>
</compile_context>

<pallas_src>
import math
import jax
import jax.numpy as jnp
from jax.experimental import pallas as pl
from jax.experimental.pallas import tpu as pltpu

# ---- small synthetic config ----
B, S, H = 2, 16, 32          # batch, max_seq_length, hidden_size
NH = 4                       # num_attention_heads
HD = H // NH                 # attention_head_size
I = 64                       # intermediate_size
Q = 8                        # max_query_length
NUM_LABELS = 2
EPS = 1e-12                  # layer_norm_eps (RoBERTa default)
INIT_RANGE = 0.02            # initializer_range
OUT_PAD = 128                # lane-dense logits width (sliced to NUM_LABELS outside)
TS = 8                       # row tile (multiple of 8)
KPAD = min(S, 128)           # question-key block rows (must cover [CLS]+question)
assert KPAD >= Q + 1 and S % TS == 0

# f32 at toy dims so the test matches the f32 reference exactly; bf16 at real dims.
MATMUL_DTYPE = jnp.float32


def _layernorm(x, g, b):
    mu = jnp.mean(x, axis=-1, keepdims=True)
    var = jnp.mean((x - mu) ** 2, axis=-1, keepdims=True)
    return (x - mu) * jax.lax.rsqrt(var + EPS) * g + b


def _gelu(x):
    # tanh approximation of GELU; EUP-friendly on TPU.
    c = math.sqrt(2.0 / math.pi)
    return 0.5 * x * (1.0 + jnp.tanh(c * (x + 0.044715 * x * x * x)))


def qa_seqtrm_kernel(pq_ref,                      # SMEM [B, 2] int32 (scalar prefetch)
                     seq_ref,                     # [TS, H]  query rows / residual
                     key_ref,                     # [KPAD, H] leading rows of this batch
                     wq_ref, bq_ref,              # [H, H] (pre-scaled by 1/sqrt(HD)), [1, H]
                     wkv_ref, bkv_ref,            # fused K|V: [H, 2H], [1, 2H]
                     wd_ref, bd_ref, g1_ref, be1_ref,
                     wf_ref, bf_ref, wfo_ref, bfo_ref, g2_ref, be2_ref,
                     wqa_ref, bqa_ref,            # padded qa head: [H, OUT_PAD], [1, OUT_PAD]
                     out_ref,                     # [TS, OUT_PAD]
                     ctx_ref):                    # VMEM scratch [TS, H] f32
    b = pl.program_id(0)
    seq = seq_ref[...].astype(jnp.float32)        # [TS, H]

    # ---- split_ques_context (sc_ques=True branch) as a [1, KPAD] additive mask ----
    # question key j sits at sequence row 1 + j of this batch; valid iff j < qlen.
    qlen = jnp.minimum(jnp.int32(Q), pq_ref[b, 0])
    col = jax.lax.broadcasted_iota(jnp.int32, (1, KPAD), 1)
    mask_add = jnp.where((col >= 1) & (col <= qlen), 0.0, -10000.0)   # f32 [1, KPAD]

    # ---- projections (1/sqrt(HD) folded into wq/bq host-side) ----
    qp = jnp.dot(seq_ref[...].astype(MATMUL_DTYPE), wq_ref[...],
                 preferred_element_type=jnp.float32) + bq_ref[...]     # [TS, H]
    kv = jnp.dot(key_ref[...].astype(MATMUL_DTYPE), wkv_ref[...],
                 preferred_element_type=jnp.float32) + bkv_ref[...]    # [KPAD, 2H]
    qp = qp.astype(MATMUL_DTYPE)
    kp = kv[:, :H].astype(MATMUL_DTYPE)
    vp = kv[:, H:].astype(MATMUL_DTYPE)

    # ---- per-head cross-attention; head contexts land in VMEM scratch ----
    for h in range(NH):                            # static unrolled head loop
        sl = slice(h * HD, (h + 1) * HD)
        sc = jax.lax.dot_general(qp[:, sl], kp[:, sl], (((1,), (1,)), ((), ())),
                                 preferred_element_type=jnp.float32) + mask_add
        sc = sc - jnp.max(sc, axis=-1, keepdims=True)
        e = jnp.exp(sc)
        p = e * pl.reciprocal(jnp.sum(e, axis=-1, keepdims=True), approx=True)
        ctx_ref[:, sl] = jnp.dot(p.astype(MATMUL_DTYPE), vp[:, sl],
                                 preferred_element_type=jnp.float32)   # [TS, HD]

    # einsum('bfnd,ndh->bfh') == ctx @ W_dense : one matmul straight from scratch
    proj = jnp.dot(ctx_ref[...].astype(MATMUL_DTYPE), wd_ref[...],
                   preferred_element_type=jnp.float32) + bd_ref[...]
    ln1 = _layernorm(seq + proj, g1_ref[...], be1_ref[...])
    ffn = _gelu(jnp.dot(ln1.astype(MATMUL_DTYPE), wf_ref[...],
                        preferred_element_type=jnp.float32) + bf_ref[...])
    ffo = jnp.dot(ffn.astype(MATMUL_DTYPE), wfo_ref[...],
                  preferred_element_type=jnp.float32) + bfo_ref[...]
    ln2 = _layernorm(ffo + ln1, g2_ref[...], be2_ref[...])

    hidden = ln2 + seq                             # residual with backbone output
    # lane-dense (128-wide) logits store; real labels live in lanes [0, NUM_LABELS)
    out_ref[...] = (jnp.dot(hidden.astype(MATMUL_DTYPE), wqa_ref[...],
                            preferred_element_type=jnp.float32)
                    + bqa_ref[...]).astype(out_ref.dtype)


def run(sequence_output, pq_end_pos, kernel_params):
    num_row_tiles = S // TS

    def seq_map(b, i, pq): return (b, i, 0)
    def key_map(b, i, pq): return (b, 0, 0)
    def w_map(b, i, pq): return (0, 0)

    in_specs = [pl.BlockSpec((None, TS, H), seq_map),        # query rows / residual
                pl.BlockSpec((None, KPAD, H), key_map)] + \
               [pl.BlockSpec(p.shape, w_map) for p in kernel_params]

    grid_spec = pltpu.PrefetchScalarGridSpec(
        num_scalar_prefetch=1,
        grid=(B, num_row_tiles),
        in_specs=in_specs,
        out_specs=pl.BlockSpec((None, TS, OUT_PAD), seq_map),
        scratch_shapes=[pltpu.VMEM((TS, H), jnp.float32)],
    )

    # advisory cost estimate so XLA can schedule around this call
    nrows = B * S
    flops = (2 * nrows * H * (2 * H + 2 * I + OUT_PAD)       # wq/dense/ffn/ffn_out/qa
             + 2 * B * KPAD * H * 2 * H                      # fused K|V projection
             + 2 * nrows * KPAD * H * 2)                     # qk^T + p@v
    transcendentals = nrows * (KPAD * NH + I + 2)
    bytes_accessed = (4 * (nrows * H + B * KPAD * H + nrows * OUT_PAD)
                      + sum(int(p.size) * p.dtype.itemsize for p in kernel_params))

    f = pl.pallas_call(
        qa_seqtrm_kernel,
        out_shape=jax.ShapeDtypeStruct((B, S, OUT_PAD), jnp.float32),
        grid_spec=grid_spec,
        compiler_params=pltpu.CompilerParams(
            dimension_semantics=("parallel", "parallel"),
            vmem_limit_bytes=32 * 1024 * 1024),
        cost_estimate=pl.CostEstimate(flops=flops,
                                      transcendentals=transcendentals,
                                      bytes_accessed=bytes_accessed),
    )
    out = f(pq_end_pos, sequence_output, sequence_output, *kernel_params)
    return out[..., :NUM_LABELS]                             # [B, S, NUM_LABELS]


def init_params(key):
    ks = jax.random.split(key, 8)

    def lin(k, fan_in, fan_out):
        # torch Linear weight is [out, in], normal(0, initializer_range), zero bias
        w = jax.random.normal(k, (fan_out, fan_in), jnp.float32) * INIT_RANGE
        return w.T, jnp.zeros((1, fan_out), jnp.float32)

    wq, bq = lin(ks[0], H, H)
    wk, bk = lin(ks[1], H, H)
    wv, bv = lin(ks[2], H, H)
    wd, bd = lin(ks[3], H, H)
    wf, bf = lin(ks[4], H, I)
    wfo, bfo = lin(ks[5], I, H)
    g1, be1 = jnp.ones((1, H), jnp.float32), jnp.zeros((1, H), jnp.float32)
    g2, be2 = jnp.ones((1, H), jnp.float32), jnp.zeros((1, H), jnp.float32)
    # qa_outputs: xavier_uniform_ weight [num_labels, H], bias filled with 0.1
    bound = math.sqrt(6.0 / (H + NUM_LABELS))
    wqa = jax.random.uniform(ks[6], (NUM_LABELS, H), jnp.float32, -bound, bound).T
    bqa = jnp.full((1, NUM_LABELS), 0.1, jnp.float32)
    return [wq, bq, wk, bk, wv, bv, wd, bd, g1, be1,
            wf, bf, wfo, bfo, g2, be2, wqa, bqa]


def pack_params(raw):
    """Host-side packing: fold 1/sqrt(HD) into wq, fuse K|V, pad qa head to 128 lanes."""
    (wq, bq, wk, bk, wv, bv, wd, bd, g1, be1,
     wf, bf, wfo, bfo, g2, be2, wqa, bqa) = raw
    scale = 1.0 / math.sqrt(HD)
    wq_s = (wq * scale).astype(MATMUL_DTYPE)
    bq_s = bq * scale
    wkv = jnp.concatenate([wk, wv], axis=1).astype(MATMUL_DTYPE)      # [H, 2H]
    bkv = jnp.concatenate([bk, bv], axis=1)                           # [1, 2H]
    wqa_pad = jnp.zeros((H, OUT_PAD), jnp.float32).at[:, :NUM_LABELS].set(wqa)
    bqa_pad = jnp.zeros((1, OUT_PAD), jnp.float32).at[:, :NUM_LABELS].set(bqa)
    return [wq_s, bq_s, wkv, bkv,
            wd.astype(MATMUL_DTYPE), bd, g1, be1,
            wf.astype(MATMUL_DTYPE), bf, wfo.astype(MATMUL_DTYPE), bfo, g2, be2,
            wqa_pad.astype(MATMUL_DTYPE), bqa_pad]


def reference(seq, pq, raw):
    (wq, bq, wk, bk, wv, bv, wd, bd, g1, be1,
     wf, bf, wfo, bfo, g2, be2, wqa, bqa) = raw
    outs = []
    for b in range(B):
        x = seq[b]
        qlen = min(Q, int(pq[b, 0]))
        ques = jnp.zeros((Q, H), jnp.float32).at[:qlen].set(x[1:1 + qlen])
        mask = jnp.zeros((Q,), jnp.float32).at[:qlen].set(1.0)
        mask_add = (1.0 - mask) * -10000.0
        qp = x @ wq + bq[0]
        kp = ques @ wk + bk[0]
        vp = ques @ wv + bv[0]
        qh = qp.reshape(S, NH, HD)
        kh = kp.reshape(Q, NH, HD)
        vh = vp.reshape(Q, NH, HD)
        sc = jnp.einsum('snd,qnd->nsq', qh, kh) / math.sqrt(HD) + mask_add[None, None, :]
        p = jax.nn.softmax(sc, axis=-1)
        ctx = jnp.einsum('nsq,qnd->snd', p, vh).reshape(S, H)
        proj = ctx @ wd + bd[0]
        ln1 = _layernorm(x + proj, g1[0], be1[0])
        ffn = _gelu(ln1 @ wf + bf[0])
        ffo = ffn @ wfo + bfo[0]
        ln2 = _layernorm(ffo + ln1, g2[0], be2[0])
        hidden = ln2 + x
        outs.append(hidden @ wqa + bqa[0])
    return jnp.stack(outs)


if __name__ == "__main__":
    key = jax.random.PRNGKey(0)
    k_seq, k_par = jax.random.split(key)
    # backbone output surrogate (XLMRobertaModel sequence_output)
    sequence_output = jax.random.normal(k_seq, (B, S, H), jnp.float32)
    # pq_end_pos[i] = (question end index, passage end index)
    pq_end_pos = jnp.array([[5, 12], [7, 14]], dtype=jnp.int32)
    raw_params = init_params(k_par)
    kernel_params = pack_params(raw_params)

    logits = run(sequence_output, pq_end_pos, kernel_params)
    logits = jax.block_until_ready(logits)
    start_logits, end_logits = logits[..., 0], logits[..., 1]   # [B, S] each

    ref = reference(sequence_output, pq_end_pos, raw_params)
    assert logits.shape == (B, S, NUM_LABELS)
    assert jnp.allclose(logits, ref, atol=5e-3, rtol=5e-3), "mismatch vs JAX reference"
    print("KERNEL_OK")
</pallas_src>

<mosaic_0001>
module attributes {stable_mosaic.version = 11 : i64} {
  func.func @qa_seqtrm_kernel(%arg0: i32, %arg1: i32, %arg2: memref<2x2xi32, #tpu.memory_space<smem>>, %arg3: memref<1x8x32xf32, #tpu.memory_space<vmem>>, %arg4: memref<1x16x32xf32, #tpu.memory_space<vmem>>, %arg5: memref<32x32xf32, #tpu.memory_space<vmem>>, %arg6: memref<1x32xf32, #tpu.memory_space<vmem>>, %arg7: memref<32x64xf32, #tpu.memory_space<vmem>>, %arg8: memref<1x64xf32, #tpu.memory_space<vmem>>, %arg9: memref<32x32xf32, #tpu.memory_space<vmem>>, %arg10: memref<1x32xf32, #tpu.memory_space<vmem>>, %arg11: memref<1x32xf32, #tpu.memory_space<vmem>>, %arg12: memref<1x32xf32, #tpu.memory_space<vmem>>, %arg13: memref<32x64xf32, #tpu.memory_space<vmem>>, %arg14: memref<1x64xf32, #tpu.memory_space<vmem>>, %arg15: memref<64x32xf32, #tpu.memory_space<vmem>>, %arg16: memref<1x32xf32, #tpu.memory_space<vmem>>, %arg17: memref<1x32xf32, #tpu.memory_space<vmem>>, %arg18: memref<1x32xf32, #tpu.memory_space<vmem>>, %arg19: memref<32x128xf32, #tpu.memory_space<vmem>>, %arg20: memref<1x128xf32, #tpu.memory_space<vmem>>, %arg21: memref<1x8x128xf32, #tpu.memory_space<vmem>>, %arg22: memref<8x32xf32, #tpu.memory_space<vmem>>) attributes {dimension_semantics = [#tpu.dimension_semantics<parallel>, #tpu.dimension_semantics<parallel>], iteration_bounds = array<i64: 2, 2>, scalar_prefetch = 1 : i64, scratch_operands = 1 : i64, tpu.core_type = #tpu.core_type<tc>, window_params = [{transform_indices = @transform_0, window_bounds = array<i64: 1, 8, 32>}, {transform_indices = @transform_1, window_bounds = array<i64: 1, 16, 32>}, {pipeline_mode = #tpu.pipeline_mode<synchronous>, transform_indices = @transform_2, window_bounds = array<i64: 32, 32>}, {pipeline_mode = #tpu.pipeline_mode<synchronous>, transform_indices = @transform_3, window_bounds = array<i64: 1, 32>}, {pipeline_mode = #tpu.pipeline_mode<synchronous>, transform_indices = @transform_4, window_bounds = array<i64: 32, 64>}, {pipeline_mode = #tpu.pipeline_mode<synchronous>, transform_indices = @transform_5, window_bounds = array<i64: 1, 64>}, {pipeline_mode = #tpu.pipeline_mode<synchronous>, transform_indices = @transform_6, window_bounds = array<i64: 32, 32>}, {pipeline_mode = #tpu.pipeline_mode<synchronous>, transform_indices = @transform_7, window_bounds = array<i64: 1, 32>}, {pipeline_mode = #tpu.pipeline_mode<synchronous>, transform_indices = @transform_8, window_bounds = array<i64: 1, 32>}, {pipeline_mode = #tpu.pipeline_mode<synchronous>, transform_indices = @transform_9, window_bounds = array<i64: 1, 32>}, {pipeline_mode = #tpu.pipeline_mode<synchronous>, transform_indices = @transform_10, window_bounds = array<i64: 32, 64>}, {pipeline_mode = #tpu.pipeline_mode<synchronous>, transform_indices = @transform_11, window_bounds = array<i64: 1, 64>}, {pipeline_mode = #tpu.pipeline_mode<synchronous>, transform_indices = @transform_12, window_bounds = array<i64: 64, 32>}, {pipeline_mode = #tpu.pipeline_mode<synchronous>, transform_indices = @transform_13, window_bounds = array<i64: 1, 32>}, {pipeline_mode = #tpu.pipeline_mode<synchronous>, transform_indices = @transform_14, window_bounds = array<i64: 1, 32>}, {pipeline_mode = #tpu.pipeline_mode<synchronous>, transform_indices = @transform_15, window_bounds = array<i64: 1, 32>}, {pipeline_mode = #tpu.pipeline_mode<synchronous>, transform_indices = @transform_16, window_bounds = array<i64: 32, 128>}, {pipeline_mode = #tpu.pipeline_mode<synchronous>, transform_indices = @transform_17, window_bounds = array<i64: 1, 128>}, {transform_indices = @transform_18, window_bounds = array<i64: 1, 8, 128>}]} {
    %c0 = arith.constant 0 : index
    %c0_0 = arith.constant 0 : index
    %c0_1 = arith.constant 0 : index
    %0 = vector.load %arg3[%c0, %c0_0, %c0_1] : memref<1x8x32xf32, #tpu.memory_space<vmem>>, vector<1x8x32xf32>
    %1 = vector.shape_cast %0 : vector<1x8x32xf32> to vector<8x32xf32>
    %2 = arith.index_cast %arg0 : i32 to index
    %c0_2 = arith.constant 0 : index
    %3 = memref.load %arg2[%2, %c0_2] : memref<2x2xi32, #tpu.memory_space<smem>>
    %c8_i32 = arith.constant 8 : i32
    %4 = arith.minsi %c8_i32, %3 : i32
    %5 = tpu.iota {dimensions = array<i32: 1>} : vector<1x16xi32>
    %c1_i32 = arith.constant 1 : i32
    %6 = vector.broadcast %c1_i32 : i32 to vector<1x16xi32>
    %7 = arith.cmpi sge, %5, %6 : vector<1x16xi32>
    %8 = vector.broadcast %4 : i32 to vector<1x16xi32>
    %9 = arith.cmpi sle, %5, %8 : vector<1x16xi32>
    %10 = arith.andi %7, %9 : vector<1x16xi1>
    %cst = arith.constant 0.000000e+00 : f32
    %cst_3 = arith.constant -1.000000e+04 : f32
    %11 = vector.broadcast %cst : f32 to vector<1x16xf32>
    %12 = vector.broadcast %cst_3 : f32 to vector<1x16xf32>
    %13 = arith.select %10, %11, %12 : vector<1x16xi1>, vector<1x16xf32>
    %c0_4 = arith.constant 0 : index
    %c0_5 = arith.constant 0 : index
    %c0_6 = arith.constant 0 : index
    %14 = vector.load %arg3[%c0_4, %c0_5, %c0_6] : memref<1x8x32xf32, #tpu.memory_space<vmem>>, vector<1x8x32xf32>
    %15 = vector.shape_cast %14 : vector<1x8x32xf32> to vector<8x32xf32>
    %c0_7 = arith.constant 0 : index
    %c0_8 = arith.constant 0 : index
    %16 = vector.load %arg5[%c0_7, %c0_8] : memref<32x32xf32, #tpu.memory_space<vmem>>, vector<32x32xf32>
    %cst_9 = arith.constant dense<0.000000e+00> : vector<8x32xf32>
    %17 = tpu.matmul %15, %16, %cst_9 {dimension_numbers = #tpu.dot_dimension_numbers<[1], [0], [0], [1], [0, 0, 1, 1], [], []>} : vector<8x32xf32>, vector<32x32xf32>, vector<8x32xf32> -> vector<8x32xf32>
    %c0_10 = arith.constant 0 : index
    %c0_11 = arith.constant 0 : index
    %18 = vector.load %arg6[%c0_10, %c0_11] : memref<1x32xf32, #tpu.memory_space<vmem>>, vector<1x32xf32>
    %19 = vector.broadcast %18 : vector<1x32xf32> to vector<8x32xf32>
    %20 = arith.addf %17, %19 : vector<8x32xf32>
    %c0_12 = arith.constant 0 : index
    %c0_13 = arith.constant 0 : index
    %c0_14 = arith.constant 0 : index
    %21 = vector.load %arg4[%c0_12, %c0_13, %c0_14] : memref<1x16x32xf32, #tpu.memory_space<vmem>>, vector<1x16x32xf32>
    %22 = vector.shape_cast %21 : vector<1x16x32xf32> to vector<16x32xf32>
    %c0_15 = arith.constant 0 : index
    %c0_16 = arith.constant 0 : index
    %23 = vector.load %arg7[%c0_15, %c0_16] : memref<32x64xf32, #tpu.memory_space<vmem>>, vector<32x64xf32>
    %cst_17 = arith.constant dense<0.000000e+00> : vector<16x64xf32>
    %24 = tpu.matmul %22, %23, %cst_17 {dimension_numbers = #tpu.dot_dimension_numbers<[1], [0], [0], [1], [0, 0, 1, 1], [], []>} : vector<16x32xf32>, vector<32x64xf32>, vector<16x64xf32> -> vector<16x64xf32>
    %c0_18 = arith.constant 0 : index
    %c0_19 = arith.constant 0 : index
    %25 = vector.load %arg8[%c0_18, %c0_19] : memref<1x64xf32, #tpu.memory_space<vmem>>, vector<1x64xf32>
    %26 = vector.broadcast %25 : vector<1x64xf32> to vector<16x64xf32>
    %27 = arith.addf %24, %26 : vector<16x64xf32>
    %28 = vector.extract_strided_slice %27 {offsets = [0, 0], sizes = [16, 32], strides = [1, 1]} : vector<16x64xf32> to vector<16x32xf32>
    %29 = vector.extract_strided_slice %27 {offsets = [0, 32], sizes = [16, 32], strides = [1, 1]} : vector<16x64xf32> to vector<16x32xf32>
    %30 = vector.extract_strided_slice %20 {offsets = [0, 0], sizes = [8, 8], strides = [1, 1]} : vector<8x32xf32> to vector<8x8xf32>
    %31 = vector.extract_strided_slice %28 {offsets = [0, 0], sizes = [16, 8], strides = [1, 1]} : vector<16x32xf32> to vector<16x8xf32>
    %cst_20 = arith.constant dense<0.000000e+00> : vector<8x16xf32>
    %32 = tpu.matmul %30, %31, %cst_20 {dimension_numbers = #tpu.dot_dimension_numbers<[1], [1], [0], [0], [0, 0, 1, 0], [], []>} : vector<8x8xf32>, vector<16x8xf32>, vector<8x16xf32> -> vector<8x16xf32>
    %33 = vector.broadcast %13 : vector<1x16xf32> to vector<8x16xf32>
    %34 = arith.addf %32, %33 : vector<8x16xf32>
    %cst_21 = arith.constant dense<0xFF800000> : vector<8xf32>
    %35 = vector.multi_reduction <maximumf>, %34, %cst_21 [1] : vector<8x16xf32> to vector<8xf32>
    %36 = vector.shape_cast %35 : vector<8xf32> to vector<8x1xf32>
    %37 = vector.broadcast %36 : vector<8x1xf32> to vector<8x16xf32>
    %38 = arith.subf %34, %37 : vector<8x16xf32>
    %39 = math.exp %38 : vector<8x16xf32>
    %cst_22 = arith.constant dense<0.000000e+00> : vector<8xf32>
    %40 = vector.multi_reduction <add>, %39, %cst_22 [1] : vector<8x16xf32> to vector<8xf32>
    %41 = vector.shape_cast %40 : vector<8xf32> to vector<8x1xf32>
    %42 = tpu.reciprocal %41 {approx = true} : vector<8x1xf32> -> vector<8x1xf32>
    %43 = vector.broadcast %42 : vector<8x1xf32> to vector<8x16xf32>
    %44 = arith.mulf %39, %43 : vector<8x16xf32>
    %45 = vector.extract_strided_slice %29 {offsets = [0, 0], sizes = [16, 8], strides = [1, 1]} : vector<16x32xf32> to vector<16x8xf32>
    %cst_23 = arith.constant dense<0.000000e+00> : vector<8x8xf32>
    %46 = tpu.matmul %44, %45, %cst_23 {dimension_numbers = #tpu.dot_dimension_numbers<[1], [0], [0], [1], [0, 0, 1, 1], [], []>} : vector<8x16xf32>, vector<16x8xf32>, vector<8x8xf32> -> vector<8x8xf32>
    %c0_24 = arith.constant 0 : index
    %c0_25 = arith.constant 0 : index
    %47 = vector.load %arg22[%c0_24, %c0_25] : memref<8x32xf32, #tpu.memory_space<vmem>>, vector<8x8xf32>
    tpu.vector_store %arg22[%c0_24, %c0_25], %46 {strides = array<i32>} : memref<8x32xf32, #tpu.memory_space<vmem>>, vector<8x8xf32>,
    %48 = vector.extract_strided_slice %20 {offsets = [0, 8], sizes = [8, 8], strides = [1, 1]} : vector<8x32xf32> to vector<8x8xf32>
    %49 = vector.extract_strided_slice %28 {offsets = [0, 8], sizes = [16, 8], strides = [1, 1]} : vector<16x32xf32> to vector<16x8xf32>
    %cst_26 = arith.constant dense<0.000000e+00> : vector<8x16xf32>
    %50 = tpu.matmul %48, %49, %cst_26 {dimension_numbers = #tpu.dot_dimension_numbers<[1], [1], [0], [0], [0, 0, 1, 0], [], []>} : vector<8x8xf32>, vector<16x8xf32>, vector<8x16xf32> -> vector<8x16xf32>
    %51 = vector.broadcast %13 : vector<1x16xf32> to vector<8x16xf32>
    %52 = arith.addf %50, %51 : vector<8x16xf32>
    %cst_27 = arith.constant dense<0xFF800000> : vector<8xf32>
    %53 = vector.multi_reduction <maximumf>, %52, %cst_27 [1] : vector<8x16xf32> to vector<8xf32>
    %54 = vector.shape_cast %53 : vector<8xf32> to vector<8x1xf32>
    %55 = vector.broadcast %54 : vector<8x1xf32> to vector<8x16xf32>
    %56 = arith.subf %52, %55 : vector<8x16xf32>
    %57 = math.exp %56 : vector<8x16xf32>
    %cst_28 = arith.constant dense<0.000000e+00> : vector<8xf32>
    %58 = vector.multi_reduction <add>, %57, %cst_28 [1] : vector<8x16xf32> to vector<8xf32>
    %59 = vector.shape_cast %58 : vector<8xf32> to vector<8x1xf32>
    %60 = tpu.reciprocal %59 {approx = true} : vector<8x1xf32> -> vector<8x1xf32>
    %61 = vector.broadcast %60 : vector<8x1xf32> to vector<8x16xf32>
    %62 = arith.mulf %57, %61 : vector<8x16xf32>
    %63 = vector.extract_strided_slice %29 {offsets = [0, 8], sizes = [16, 8], strides = [1, 1]} : vector<16x32xf32> to vector<16x8xf32>
    %cst_29 = arith.constant dense<0.000000e+00> : vector<8x8xf32>
    %64 = tpu.matmul %62, %63, %cst_29 {dimension_numbers = #tpu.dot_dimension_numbers<[1], [0], [0], [1], [0, 0, 1, 1], [], []>} : vector<8x16xf32>, vector<16x8xf32>, vector<8x8xf32> -> vector<8x8xf32>
    %c0_30 = arith.constant 0 : index
    %c8 = arith.constant 8 : index
    %65 = vector.load %arg22[%c0_30, %c8] : memref<8x32xf32, #tpu.memory_space<vmem>>, vector<8x8xf32>
    tpu.vector_store %arg22[%c0_30, %c8], %64 {strides = array<i32>} : memref<8x32xf32, #tpu.memory_space<vmem>>, vector<8x8xf32>,
    %66 = vector.extract_strided_slice %20 {offsets = [0, 16], sizes = [8, 8], strides = [1, 1]} : vector<8x32xf32> to vector<8x8xf32>
    %67 = vector.extract_strided_slice %28 {offsets = [0, 16], sizes = [16, 8], strides = [1, 1]} : vector<16x32xf32> to vector<16x8xf32>
    %cst_31 = arith.constant dense<0.000000e+00> : vector<8x16xf32>
    %68 = tpu.matmul %66, %67, %cst_31 {dimension_numbers = #tpu.dot_dimension_numbers<[1], [1], [0], [0], [0, 0, 1, 0], [], []>} : vector<8x8xf32>, vector<16x8xf32>, vector<8x16xf32> -> vector<8x16xf32>
    %69 = vector.broadcast %13 : vector<1x16xf32> to vector<8x16xf32>
    %70 = arith.addf %68, %69 : vector<8x16xf32>
    %cst_32 = arith.constant dense<0xFF800000> : vector<8xf32>
    %71 = vector.multi_reduction <maximumf>, %70, %cst_32 [1] : vector<8x16xf32> to vector<8xf32>
    %72 = vector.shape_cast %71 : vector<8xf32> to vector<8x1xf32>
    %73 = vector.broadcast %72 : vector<8x1xf32> to vector<8x16xf32>
    %74 = arith.subf %70, %73 : vector<8x16xf32>
    %75 = math.exp %74 : vector<8x16xf32>
    %cst_33 = arith.constant dense<0.000000e+00> : vector<8xf32>
    %76 = vector.multi_reduction <add>, %75, %cst_33 [1] : vector<8x16xf32> to vector<8xf32>
    %77 = vector.shape_cast %76 : vector<8xf32> to vector<8x1xf32>
    %78 = tpu.reciprocal %77 {approx = true} : vector<8x1xf32> -> vector<8x1xf32>
    %79 = vector.broadcast %78 : vector<8x1xf32> to vector<8x16xf32>
    %80 = arith.mulf %75, %79 : vector<8x16xf32>
    %81 = vector.extract_strided_slice %29 {offsets = [0, 16], sizes = [16, 8], strides = [1, 1]} : vector<16x32xf32> to vector<16x8xf32>
    %cst_34 = arith.constant dense<0.000000e+00> : vector<8x8xf32>
    %82 = tpu.matmul %80, %81, %cst_34 {dimension_numbers = #tpu.dot_dimension_numbers<[1], [0], [0], [1], [0, 0, 1, 1], [], []>} : vector<8x16xf32>, vector<16x8xf32>, vector<8x8xf32> -> vector<8x8xf32>
    %c0_35 = arith.constant 0 : index
    %c16 = arith.constant 16 : index
    %83 = vector.load %arg22[%c0_35, %c16] : memref<8x32xf32, #tpu.memory_space<vmem>>, vector<8x8xf32>
    tpu.vector_store %arg22[%c0_35, %c16], %82 {strides = array<i32>} : memref<8x32xf32, #tpu.memory_space<vmem>>, vector<8x8xf32>,
    %84 = vector.extract_strided_slice %20 {offsets = [0, 24], sizes = [8, 8], strides = [1, 1]} : vector<8x32xf32> to vector<8x8xf32>
    %85 = vector.extract_strided_slice %28 {offsets = [0, 24], sizes = [16, 8], strides = [1, 1]} : vector<16x32xf32> to vector<16x8xf32>
    %cst_36 = arith.constant dense<0.000000e+00> : vector<8x16xf32>
    %86 = tpu.matmul %84, %85, %cst_36 {dimension_numbers = #tpu.dot_dimension_numbers<[1], [1], [0], [0], [0, 0, 1, 0], [], []>} : vector<8x8xf32>, vector<16x8xf32>, vector<8x16xf32> -> vector<8x16xf32>
    %87 = vector.broadcast %13 : vector<1x16xf32> to vector<8x16xf32>
    %88 = arith.addf %86, %87 : vector<8x16xf32>
    %cst_37 = arith.constant dense<0xFF800000> : vector<8xf32>
    %89 = vector.multi_reduction <maximumf>, %88, %cst_37 [1] : vector<8x16xf32> to vector<8xf32>
    %90 = vector.shape_cast %89 : vector<8xf32> to vector<8x1xf32>
    %91 = vector.broadcast %90 : vector<8x1xf32> to vector<8x16xf32>
    %92 = arith.subf %88, %91 : vector<8x16xf32>
    %93 = math.exp %92 : vector<8x16xf32>
    %cst_38 = arith.constant dense<0.000000e+00> : vector<8xf32>
    %94 = vector.multi_reduction <add>, %93, %cst_38 [1] : vector<8x16xf32> to vector<8xf32>
    %95 = vector.shape_cast %94 : vector<8xf32> to vector<8x1xf32>
    %96 = tpu.reciprocal %95 {approx = true} : vector<8x1xf32> -> vector<8x1xf32>
    %97 = vector.broadcast %96 : vector<8x1xf32> to vector<8x16xf32>
    %98 = arith.mulf %93, %97 : vector<8x16xf32>
    %99 = vector.extract_strided_slice %29 {offsets = [0, 24], sizes = [16, 8], strides = [1, 1]} : vector<16x32xf32> to vector<16x8xf32>
    %cst_39 = arith.constant dense<0.000000e+00> : vector<8x8xf32>
    %100 = tpu.matmul %98, %99, %cst_39 {dimension_numbers = #tpu.dot_dimension_numbers<[1], [0], [0], [1], [0, 0, 1, 1], [], []>} : vector<8x16xf32>, vector<16x8xf32>, vector<8x8xf32> -> vector<8x8xf32>
    %c0_40 = arith.constant 0 : index
    %c24 = arith.constant 24 : index
    %101 = vector.load %arg22[%c0_40, %c24] : memref<8x32xf32, #tpu.memory_space<vmem>>, vector<8x8xf32>
    tpu.vector_store %arg22[%c0_40, %c24], %100 {strides = array<i32>} : memref<8x32xf32, #tpu.memory_space<vmem>>, vector<8x8xf32>,
    %c0_41 = arith.constant 0 : index
    %c0_42 = arith.constant 0 : index
    %102 = vector.load %arg22[%c0_41, %c0_42] : memref<8x32xf32, #tpu.memory_space<vmem>>, vector<8x32xf32>
    %c0_43 = arith.constant 0 : index
    %c0_44 = arith.constant 0 : index
    %103 = vector.load %arg9[%c0_43, %c0_44] : memref<32x32xf32, #tpu.memory_space<vmem>>, vector<32x32xf32>
    %cst_45 = arith.constant dense<0.000000e+00> : vector<8x32xf32>
    %104 = tpu.matmul %102, %103, %cst_45 {dimension_numbers = #tpu.dot_dimension_numbers<[1], [0], [0], [1], [0, 0, 1, 1], [], []>} : vector<8x32xf32>, vector<32x32xf32>, vector<8x32xf32> -> vector<8x32xf32>
    %c0_46 = arith.constant 0 : index
    %c0_47 = arith.constant 0 : index
    %105 = vector.load %arg10[%c0_46, %c0_47] : memref<1x32xf32, #tpu.memory_space<vmem>>, vector<1x32xf32>
    %106 = vector.broadcast %105 : vector<1x32xf32> to vector<8x32xf32>
    %107 = arith.addf %104, %106 : vector<8x32xf32>
    %108 = arith.addf %1, %107 : vector<8x32xf32>
    %c0_48 = arith.constant 0 : index
    %c0_49 = arith.constant 0 : index
    %109 = vector.load %arg11[%c0_48, %c0_49] : memref<1x32xf32, #tpu.memory_space<vmem>>, vector<1x32xf32>
    %c0_50 = arith.constant 0 : index
    %c0_51 = arith.constant 0 : index
    %110 = vector.load %arg12[%c0_50, %c0_51] : memref<1x32xf32, #tpu.memory_space<vmem>>, vector<1x32xf32>
    %cst_52 = arith.constant dense<0.000000e+00> : vector<8xf32>
    %111 = vector.multi_reduction <add>, %108, %cst_52 [1] : vector<8x32xf32> to vector<8xf32>
    %112 = vector.shape_cast %111 : vector<8xf32> to vector<8x1xf32>
    %cst_53 = arith.constant 3.200000e+01 : f32
    %113 = vector.broadcast %cst_53 : f32 to vector<8x1xf32>
    %114 = arith.divf %112, %113 : vector<8x1xf32>
    %115 = vector.broadcast %114 : vector<8x1xf32> to vector<8x32xf32>
    %116 = arith.subf %108, %115 : vector<8x32xf32>
    %117 = arith.mulf %116, %116 : vector<8x32xf32>
    %cst_54 = arith.constant dense<0.000000e+00> : vector<8xf32>
    %118 = vector.multi_reduction <add>, %117, %cst_54 [1] : vector<8x32xf32> to vector<8xf32>
    %119 = vector.shape_cast %118 : vector<8xf32> to vector<8x1xf32>
    %cst_55 = arith.constant 3.200000e+01 : f32
    %120 = vector.broadcast %cst_55 : f32 to vector<8x1xf32>
    %121 = arith.divf %119, %120 : vector<8x1xf32>
    %122 = vector.broadcast %114 : vector<8x1xf32> to vector<8x32xf32>
    %123 = arith.subf %108, %122 : vector<8x32xf32>
    %cst_56 = arith.constant 9.99999996E-13 : f32
    %124 = vector.broadcast %cst_56 : f32 to vector<8x1xf32>
    %125 = arith.addf %121, %124 : vector<8x1xf32>
    %126 = math.rsqrt %125 : vector<8x1xf32>
    %127 = vector.broadcast %126 : vector<8x1xf32> to vector<8x32xf32>
    %128 = arith.mulf %123, %127 : vector<8x32xf32>
    %129 = vector.broadcast %109 : vector<1x32xf32> to vector<8x32xf32>
    %130 = arith.mulf %128, %129 : vector<8x32xf32>
    %131 = vector.broadcast %110 : vector<1x32xf32> to vector<8x32xf32>
    %132 = arith.addf %130, %131 : vector<8x32xf32>
    %c0_57 = arith.constant 0 : index
    %c0_58 = arith.constant 0 : index
    %133 = vector.load %arg13[%c0_57, %c0_58] : memref<32x64xf32, #tpu.memory_space<vmem>>, vector<32x64xf32>
    %cst_59 = arith.constant dense<0.000000e+00> : vector<8x64xf32>
    %134 = tpu.matmul %132, %133, %cst_59 {dimension_numbers = #tpu.dot_dimension_numbers<[1], [0], [0], [1], [0, 0, 1, 1], [], []>} : vector<8x32xf32>, vector<32x64xf32>, vector<8x64xf32> -> vector<8x64xf32>
    %c0_60 = arith.constant 0 : index
    %c0_61 = arith.constant 0 : index
    %135 = vector.load %arg14[%c0_60, %c0_61] : memref<1x64xf32, #tpu.memory_space<vmem>>, vector<1x64xf32>
    %136 = vector.broadcast %135 : vector<1x64xf32> to vector<8x64xf32>
    %137 = arith.addf %134, %136 : vector<8x64xf32>
    %cst_62 = arith.constant 5.000000e-01 : f32
    %138 = vector.broadcast %cst_62 : f32 to vector<8x64xf32>
    %139 = arith.mulf %138, %137 : vector<8x64xf32>
    %cst_63 = arith.constant 4.471500e-02 : f32
    %140 = vector.broadcast %cst_63 : f32 to vector<8x64xf32>
    %141 = arith.mulf %140, %137 : vector<8x64xf32>
    %142 = arith.mulf %141, %137 : vector<8x64xf32>
    %143 = arith.mulf %142, %137 : vector<8x64xf32>
    %144 = arith.addf %137, %143 : vector<8x64xf32>
    %cst_64 = arith.constant 0.797884583 : f32
    %145 = vector.broadcast %cst_64 : f32 to vector<8x64xf32>
    %146 = arith.mulf %145, %144 : vector<8x64xf32>
    %147 = math.tanh %146 : vector<8x64xf32>
    %cst_65 = arith.constant 1.000000e+00 : f32
    %148 = vector.broadcast %cst_65 : f32 to vector<8x64xf32>
    %149 = arith.addf %148, %147 : vector<8x64xf32>
    %150 = arith.mulf %139, %149 : vector<8x64xf32>
    %c0_66 = arith.constant 0 : index
    %c0_67 = arith.constant 0 : index
    %151 = vector.load %arg15[%c0_66, %c0_67] : memref<64x32xf32, #tpu.memory_space<vmem>>, vector<64x32xf32>
    %cst_68 = arith.constant dense<0.000000e+00> : vector<8x32xf32>
    %152 = tpu.matmul %150, %151, %cst_68 {dimension_numbers = #tpu.dot_dimension_numbers<[1], [0], [0], [1], [0, 0, 1, 1], [], []>} : vector<8x64xf32>, vector<64x32xf32>, vector<8x32xf32> -> vector<8x32xf32>
    %c0_69 = arith.constant 0 : index
    %c0_70 = arith.constant 0 : index
    %153 = vector.load %arg16[%c0_69, %c0_70] : memref<1x32xf32, #tpu.memory_space<vmem>>, vector<1x32xf32>
    %154 = vector.broadcast %153 : vector<1x32xf32> to vector<8x32xf32>
    %155 = arith.addf %152, %154 : vector<8x32xf32>
    %156 = arith.addf %155, %132 : vector<8x32xf32>
    %c0_71 = arith.constant 0 : index
    %c0_72 = arith.constant 0 : index
    %157 = vector.load %arg17[%c0_71, %c0_72] : memref<1x32xf32, #tpu.memory_space<vmem>>, vector<1x32xf32>
    %c0_73 = arith.constant 0 : index
    %c0_74 = arith.constant 0 : index
    %158 = vector.load %arg18[%c0_73, %c0_74] : memref<1x32xf32, #tpu.memory_space<vmem>>, vector<1x32xf32>
    %cst_75 = arith.constant dense<0.000000e+00> : vector<8xf32>
    %159 = vector.multi_reduction <add>, %156, %cst_75 [1] : vector<8x32xf32> to vector<8xf32>
    %160 = vector.shape_cast %159 : vector<8xf32> to vector<8x1xf32>
    %cst_76 = arith.constant 3.200000e+01 : f32
    %161 = vector.broadcast %cst_76 : f32 to vector<8x1xf32>
    %162 = arith.divf %160, %161 : vector<8x1xf32>
    %163 = vector.broadcast %162 : vector<8x1xf32> to vector<8x32xf32>
    %164 = arith.subf %156, %163 : vector<8x32xf32>
    %165 = arith.mulf %164, %164 : vector<8x32xf32>
    %cst_77 = arith.constant dense<0.000000e+00> : vector<8xf32>
    %166 = vector.multi_reduction <add>, %165, %cst_77 [1] : vector<8x32xf32> to vector<8xf32>
    %167 = vector.shape_cast %166 : vector<8xf32> to vector<8x1xf32>
    %cst_78 = arith.constant 3.200000e+01 : f32
    %168 = vector.broadcast %cst_78 : f32 to vector<8x1xf32>
    %169 = arith.divf %167, %168 : vector<8x1xf32>
    %170 = vector.broadcast %162 : vector<8x1xf32> to vector<8x32xf32>
    %171 = arith.subf %156, %170 : vector<8x32xf32>
    %cst_79 = arith.constant 9.99999996E-13 : f32
    %172 = vector.broadcast %cst_79 : f32 to vector<8x1xf32>
    %173 = arith.addf %169, %172 : vector<8x1xf32>
    %174 = math.rsqrt %173 : vector<8x1xf32>
    %175 = vector.broadcast %174 : vector<8x1xf32> to vector<8x32xf32>
    %176 = arith.mulf %171, %175 : vector<8x32xf32>
    %177 = vector.broadcast %157 : vector<1x32xf32> to vector<8x32xf32>
    %178 = arith.mulf %176, %177 : vector<8x32xf32>
    %179 = vector.broadcast %158 : vector<1x32xf32> to vector<8x32xf32>
    %180 = arith.addf %178, %179 : vector<8x32xf32>
    %181 = arith.addf %180, %1 : vector<8x32xf32>
    %c0_80 = arith.constant 0 : index
    %c0_81 = arith.constant 0 : index
    %182 = vector.load %arg19[%c0_80, %c0_81] : memref<32x128xf32, #tpu.memory_space<vmem>>, vector<32x128xf32>
    %cst_82 = arith.constant dense<0.000000e+00> : vector<8x128xf32>
    %183 = tpu.matmul %181, %182, %cst_82 {dimension_numbers = #tpu.dot_dimension_numbers<[1], [0], [0], [1], [0, 0, 1, 1], [], []>} : vector<8x32xf32>, vector<32x128xf32>, vector<8x128xf32> -> vector<8x128xf32>
    %c0_83 = arith.constant 0 : index
    %c0_84 = arith.constant 0 : index
    %184 = vector.load %arg20[%c0_83, %c0_84] : memref<1x128xf32, #tpu.memory_space<vmem>>, vector<1x128xf32>
    %185 = vector.broadcast %184 : vector<1x128xf32> to vector<8x128xf32>
    %186 = arith.addf %183, %185 : vector<8x128xf32>
    %c0_85 = arith.constant 0 : index
    %c0_86 = arith.constant 0 : index
    %c0_87 = arith.constant 0 : index
    %187 = vector.load %arg21[%c0_85, %c0_86, %c0_87] : memref<1x8x128xf32, #tpu.memory_space<vmem>>, vector<1x8x128xf32>
    %188 = vector.shape_cast %187 : vector<1x8x128xf32> to vector<8x128xf32>
    %189 = vector.shape_cast %186 : vector<8x128xf32> to vector<1x8x128xf32>
    tpu.vector_store %arg21[%c0_85, %c0_86, %c0_87], %189 {strides = array<i32>} : memref<1x8x128xf32, #tpu.memory_space<vmem>>, vector<1x8x128xf32>,
    return
  }
  func.func @transform_0(%arg0: i32, %arg1: i32, %arg2: memref<2x2xi32, #tpu.memory_space<smem>>) -> (i32, i32, i32) {
    %c0_i32 = arith.constant 0 : i32
    %c0_i32_0 = arith.constant 0 : i32
    return %arg0, %arg1, %c0_i32 : i32, i32, i32
  }
  func.func @transform_1(%arg0: i32, %arg1: i32, %arg2: memref<2x2xi32, #tpu.memory_space<smem>>) -> (i32, i32, i32) {
    %c0_i32 = arith.constant 0 : i32
    %c0_i32_0 = arith.constant 0 : i32
    %c0_i32_1 = arith.constant 0 : i32
    return %arg0, %c0_i32, %c0_i32_0 : i32, i32, i32
  }
  func.func @transform_2(%arg0: i32, %arg1: i32, %arg2: memref<2x2xi32, #tpu.memory_space<smem>>) -> (i32, i32) {
    %c0_i32 = arith.constant 0 : i32
    %c0_i32_0 = arith.constant 0 : i32
    %c0_i32_1 = arith.constant 0 : i32
    return %c0_i32, %c0_i32_0 : i32, i32
  }
  func.func @transform_3(%arg0: i32, %arg1: i32, %arg2: memref<2x2xi32, #tpu.memory_space<smem>>) -> (i32, i32) {
    %c0_i32 = arith.constant 0 : i32
    %c0_i32_0 = arith.constant 0 : i32
    %c0_i32_1 = arith.constant 0 : i32
    return %c0_i32, %c0_i32_0 : i32, i32
  }
  func.func @transform_4(%arg0: i32, %arg1: i32, %arg2: memref<2x2xi32, #tpu.memory_space<smem>>) -> (i32, i32) {
    %c0_i32 = arith.constant 0 : i32
    %c0_i32_0 = arith.constant 0 : i32
    %c0_i32_1 = arith.constant 0 : i32
    return %c0_i32, %c0_i32_0 : i32, i32
  }
  func.func @transform_5(%arg0: i32, %arg1: i32, %arg2: memref<2x2xi32, #tpu.memory_space<smem>>) -> (i32, i32) {
    %c0_i32 = arith.constant 0 : i32
    %c0_i32_0 = arith.constant 0 : i32
    %c0_i32_1 = arith.constant 0 : i32
    return %c0_i32, %c0_i32_0 : i32, i32
  }
  func.func @transform_6(%arg0: i32, %arg1: i32, %arg2: memref<2x2xi32, #tpu.memory_space<smem>>) -> (i32, i32) {
    %c0_i32 = arith.constant 0 : i32
    %c0_i32_0 = arith.constant 0 : i32
    %c0_i32_1 = arith.constant 0 : i32
    return %c0_i32, %c0_i32_0 : i32, i32
  }
  func.func @transform_7(%arg0: i32, %arg1: i32, %arg2: memref<2x2xi32, #tpu.memory_space<smem>>) -> (i32, i32) {
    %c0_i32 = arith.constant 0 : i32
    %c0_i32_0 = arith.constant 0 : i32
    %c0_i32_1 = arith.constant 0 : i32
    return %c0_i32, %c0_i32_0 : i32, i32
  }
  func.func @transform_8(%arg0: i32, %arg1: i32, %arg2: memref<2x2xi32, #tpu.memory_space<smem>>) -> (i32, i32) {
    %c0_i32 = arith.constant 0 : i32
    %c0_i32_0 = arith.constant 0 : i32
    %c0_i32_1 = arith.constant 0 : i32
    return %c0_i32, %c0_i32_0 : i32, i32
  }
  func.func @transform_9(%arg0: i32, %arg1: i32, %arg2: memref<2x2xi32, #tpu.memory_space<smem>>) -> (i32, i32) {
    %c0_i32 = arith.constant 0 : i32
    %c0_i32_0 = arith.constant 0 : i32
    %c0_i32_1 = arith.constant 0 : i32
    return %c0_i32, %c0_i32_0 : i32, i32
  }
  func.func @transform_10(%arg0: i32, %arg1: i32, %arg2: memref<2x2xi32, #tpu.memory_space<smem>>) -> (i32, i32) {
    %c0_i32 = arith.constant 0 : i32
    %c0_i32_0 = arith.constant 0 : i32
    %c0_i32_1 = arith.constant 0 : i32
    return %c0_i32, %c0_i32_0 : i32, i32
  }
  func.func @transform_11(%arg0: i32, %arg1: i32, %arg2: memref<2x2xi32, #tpu.memory_space<smem>>) -> (i32, i32) {
    %c0_i32 = arith.constant 0 : i32
    %c0_i32_0 = arith.constant 0 : i32
    %c0_i32_1 = arith.constant 0 : i32
    return %c0_i32, %c0_i32_0 : i32, i32
  }
  func.func @transform_12(%arg0: i32, %arg1: i32, %arg2: memref<2x2xi32, #tpu.memory_space<smem>>) -> (i32, i32) {
    %c0_i32 = arith.constant 0 : i32
    %c0_i32_0 = arith.constant 0 : i32
    %c0_i32_1 = arith.constant 0 : i32
    return %c0_i32, %c0_i32_0 : i32, i32
  }
  func.func @transform_13(%arg0: i32, %arg1: i32, %arg2: memref<2x2xi32, #tpu.memory_space<smem>>) -> (i32, i32) {
    %c0_i32 = arith.constant 0 : i32
    %c0_i32_0 = arith.constant 0 : i32
    %c0_i32_1 = arith.constant 0 : i32
    return %c0_i32, %c0_i32_0 : i32, i32
  }
  func.func @transform_14(%arg0: i32, %arg1: i32, %arg2: memref<2x2xi32, #tpu.memory_space<smem>>) -> (i32, i32) {
    %c0_i32 = arith.constant 0 : i32
    %c0_i32_0 = arith.constant 0 : i32
    %c0_i32_1 = arith.constant 0 : i32
    return %c0_i32, %c0_i32_0 : i32, i32
  }
  func.func @transform_15(%arg0: i32, %arg1: i32, %arg2: memref<2x2xi32, #tpu.memory_space<smem>>) -> (i32, i32) {
    %c0_i32 = arith.constant 0 : i32
    %c0_i32_0 = arith.constant 0 : i32
    %c0_i32_1 = arith.constant 0 : i32
    return %c0_i32, %c0_i32_0 : i32, i32
  }
  func.func @transform_16(%arg0: i32, %arg1: i32, %arg2: memref<2x2xi32, #tpu.memory_space<smem>>) -> (i32, i32) {
    %c0_i32 = arith.constant 0 : i32
    %c0_i32_0 = arith.constant 0 : i32
    %c0_i32_1 = arith.constant 0 : i32
    return %c0_i32, %c0_i32_0 : i32, i32
  }
  func.func @transform_17(%arg0: i32, %arg1: i32, %arg2: memref<2x2xi32, #tpu.memory_space<smem>>) -> (i32, i32) {
    %c0_i32 = arith.constant 0 : i32
    %c0_i32_0 = arith.constant 0 : i32
    %c0_i32_1 = arith.constant 0 : i32
    return %c0_i32, %c0_i32_0 : i32, i32
  }
  func.func @transform_18(%arg0: i32, %arg1: i32, %arg2: memref<2x2xi32, #tpu.memory_space<smem>>) -> (i32, i32, i32) {
    %c0_i32 = arith.constant 0 : i32
    %c0_i32_0 = arith.constant 0 : i32
    return %arg0, %arg1, %c0_i32 : i32, i32, i32
  }
}

</mosaic_0001>

<llo_original>
// kernel: tpu_custom_call.1
$region0: #{tpu_custom_call.1}
  #allocation0 [shape = 'u32[]', space=smem, size = 0x4, offset = 0x4, fixed_abs, tag = 'smem constant byte address 0x4 - core index']
  #allocation1 [shape = 'u32[72,128]{1,0:T(1,128)}', space=vmem, size = 0x9000, scoped, tag = 'internal scratch']
  #allocation2 [shape = 'f32[8,32]{1,0:T(8,128)}', space=vmem, size = 0x1000, scoped, tag = 'scratch operand']
  #allocation3 [shape = 's32[1]{0}', space=sflag, size = 0x4, scoped, tag = 'scoped memory for tpu_custom_call.1']
  #allocation4 [shape = 'u8[1024]{0}', space=smem, size = 0x400, scoped, tag = 'prefetched SMEM operand 0']
  %s0 = inlined_call_operand.hbm [shape: s32[2,2], index: 0, kind: input, shape index: {}]
  %s1 = inlined_call_operand.vmem [shape: f32[2,16,32], index: 1, kind: input, shape index: {}]
  %s2 = inlined_call_operand.vmem [shape: f32[2,16,32], index: 2, kind: input, shape index: {}]
  %s3 = inlined_call_operand.vmem [shape: f32[32,32], index: 3, kind: input, shape index: {}]
  %s4 = inlined_call_operand.vmem [shape: f32[1,32], index: 4, kind: input, shape index: {}]
  %s5 = inlined_call_operand.hbm [shape: f32[32,64], index: 5, kind: input, shape index: {}]
  %s6 = inlined_call_operand.vmem [shape: f32[1,64], index: 6, kind: input, shape index: {}]
  %s7 = inlined_call_operand.hbm [shape: f32[32,32], index: 7, kind: input, shape index: {}]
  %s8 = inlined_call_operand.vmem [shape: f32[1,32], index: 8, kind: input, shape index: {}]
  %s9 = inlined_call_operand.vmem [shape: f32[1,32], index: 9, kind: input, shape index: {}]
  %s10 = inlined_call_operand.vmem [shape: f32[1,32], index: 10, kind: input, shape index: {}]
  %s11 = inlined_call_operand.hbm [shape: f32[32,64], index: 11, kind: input, shape index: {}]
  %s12 = inlined_call_operand.vmem [shape: f32[1,64], index: 12, kind: input, shape index: {}]
  %s13 = inlined_call_operand.vmem [shape: f32[64,32], index: 13, kind: input, shape index: {}]
  %s14 = inlined_call_operand.vmem [shape: f32[1,32], index: 14, kind: input, shape index: {}]
  %s15 = inlined_call_operand.vmem [shape: f32[1,32], index: 15, kind: input, shape index: {}]
  %s16 = inlined_call_operand.vmem [shape: f32[1,32], index: 16, kind: input, shape index: {}]
  %s17 = inlined_call_operand.hbm [shape: f32[32,128], index: 17, kind: input, shape index: {}]
  %s18 = inlined_call_operand.vmem [shape: f32[1,128], index: 18, kind: input, shape index: {}]
  %s19 = inlined_call_operand.hbm [shape: f32[2,16,128], index: 19, kind: output, shape index: {}]
  %s20 = sld [smem:[#allocation0]]
  $region121: #{tpu_custom_call.1} parent=0
    _
  %s22 = ssub.s32 1, %s20
  %s23 = scalar_select 0, %s22, %s20
  %s25 = sshll.u32 %s0, 4
  %s26 = int_to_ptr.hbm [resolvable:$true] %s25
  %28 = dma.hbm_to_smem %s26, 32, [#allocation4], [#allocation3]
  %30 = dma.done [#allocation3], 32
  %31 = sfence
  $region1: #{tpu_custom_call.1} parent=0
    #allocation5 [shape = 'u8[16384]{0}', space=vmem, size = 0x4000, scoped, tag = 'input window, operand 5, single buffered']
    #allocation6 [shape = 's32[2]{0}', space=sflag, size = 0x8, scoped, tag = 'scoped memory for tpu_custom_call.1']
    #allocation7 [shape = 's32[2]{0}', space=sflag, size = 0x8, scoped, tag = 'scoped memory for tpu_custom_call.1']
    #allocation8 [shape = 'u8[16384]{0}', space=vmem, size = 0x4000, scoped, tag = 'input window, operand 7, single buffered']
    #allocation9 [shape = 's32[1]{0}', space=sflag, size = 0x4, scoped, tag = 'scoped memory for tpu_custom_call.1']
    #allocation10 [shape = 'u8[16384]{0}', space=vmem, size = 0x4000, scoped, tag = 'input window, operand 11, single buffered']
    #allocation11 [shape = 'u8[16384]{0}', space=vmem, size = 0x4000, scoped, tag = 'input window, operand 17, single buffered']
    #allocation12 [shape = 's32[1]{0}', space=sflag, size = 0x4, scoped, tag = 'scoped memory for tpu_custom_call.1']
    #allocation13 [shape = 'u8[8192]{0}', space=vmem, size = 0x2000, scoped, tag = 'output window, operand 0']
    %32 = vsyncpa [#allocation6], 0
    %33 = vsyncpa [#allocation9], 0
    %34 = vsyncpa [#allocation12], 0
    %35 = vsyncpa [#allocation7], 0
    %s36 = scalar_lea.sflag [#allocation7], 1
    %37 = vsyncpa %s36, 0
    loop: start=0, step=1, limit=6
    $region2: #{tpu_custom_call.1} parent=1 // loop_pre_header
      _
    $region3: #{tpu_custom_call.1} parent=1 // loop_header
      %s39 = sphi 0, %s43
      %p40 = scmp.ge.s32.totalorder %s39, 6
      %s46 = sphi 0, %s58
      %s47 = sphi 0, %s54
      %s48 = sphi 0, %s46
      %s49 = sphi 0, %s47
      %s50 = sphi 0, %s48
      %s51 = sphi 0, %s49
      %s63 = sphi 0, %s65
      %s66 = sphi 0, %s63
      %s67 = sphi 0, %s66
      %s83 = sphi 0, %s67
      %s89 = sphi 0, %s91
      %s92 = sphi 0, %s89
      %s93 = sphi 0, %s92
      %s109 = sphi 0, %s93
      %s113 = sphi 0, %s113
      %s115 = sphi 0, %s113
      %s116 = sphi 0, %s115
      %s130 = sphi 0, %s116
      %s134 = sphi 0, %s134
      %s136 = sphi 0, %s134
      %s137 = sphi 0, %s136
      %s151 = sphi 0, %s137
      %s155 = sphi 0, %s155
      %s157 = sphi 0, %s155
      %s158 = sphi 0, %s157
      %s172 = sphi 0, %s158
      %s176 = sphi 0, %s176
      %s178 = sphi 0, %s176
      %s179 = sphi 0, %s178
      %s193 = sphi 0, %s179
      %s197 = sphi 0, %s197
      %s199 = sphi 0, %s197
      %s200 = sphi 0, %s199
      %s214 = sphi 0, %s200
      %s218 = sphi 0, %s218
      %s220 = sphi 0, %s218
      %s221 = sphi 0, %s220
      %s235 = sphi 0, %s221
      %s239 = sphi 0, %s239
      %s241 = sphi 0, %s239
      %s242 = sphi 0, %s241
      %s256 = sphi 0, %s242
      %s260 = sphi 0, %s260
      %s262 = sphi 0, %s260
      %s263 = sphi 0, %s262
      %s277 = sphi 0, %s263
      %s281 = sphi 0, %s281
      %s283 = sphi 0, %s281
      %s284 = sphi 0, %s283
      %s298 = sphi 0, %s284
      %s302 = sphi 0, %s302
      %s304 = sphi 0, %s302
      %s305 = sphi 0, %s304
      %s319 = sphi 0, %s305
      %s323 = sphi 0, %s323
      %s325 = sphi 0, %s323
      %s326 = sphi 0, %s325
      %s340 = sphi 0, %s326
      %s344 = sphi 0, %s344
      %s346 = sphi 0, %s344
      %s347 = sphi 0, %s346
      %s361 = sphi 0, %s347
      %s365 = sphi 0, %s365
      %s367 = sphi 0, %s365
      %s368 = sphi 0, %s367
      %s382 = sphi 0, %s368
      %s386 = sphi 0, %s386
      %s388 = sphi 0, %s386
      %s389 = sphi 0, %s388
      %s403 = sphi 0, %s389
      %s407 = sphi 0, %s407
      %s409 = sphi 0, %s407
      %s410 = sphi 0, %s409
      %s424 = sphi 0, %s410
      %s428 = sphi 0, %s428
      %s430 = sphi 0, %s428
      %s431 = sphi 0, %s430
      %s445 = sphi 0, %s431
      %s453 = sphi 0, %s455
      %s456 = sphi 0, %s453
      %s457 = sphi 0, %s456
      %s473 = sphi 0, %s457
    $region4: #{tpu_custom_call.1} parent=1 // loop_header_branch
      %42 = sbr.rel (%p40) target = $region8
    $region5: #{tpu_custom_call.1} parent=1 // loop_body
      %s44 = ssub.s32 %s39, 1
      %s45 = ssub.s32 %s39, 2
      %s52 = sadd.s32 1, %s47
      %p53 = scmp.ge.s32.totalorder %s52, 2
      %s54 = scalar_select %p53, 0, %s52
      %s55 = sadd.s32 1, %s46
      %s56 = scalar_select %p53, %s55, %s46
      %p57 = scmp.ge.s32.totalorder %s56, 2
      %s58 = scalar_select %p57, 0, %s56
      %s59 = ssub.s32 %s46, %s58
      %s60 = ssub.s32 %s47, %s54
      %s61 = sor.u32 %s59, %s60
      %p62 = scmp.eq.s32.totalorder %s61, 0
      %s64 = sadd.s32 %s63, 1
      %s65 = scalar_select %p62, %s63, %s64
      %p68 = pneg %p62
      %p69 = scmp.eq.s32.totalorder %s39, 3
      %p70 = por %p68, %p69
      %p71 = scmp.ne.s32.totalorder %s63, %s66
      %p72 = scmp.eq.s32.totalorder %s39, 0
      %p73 = por %p71, %p72
      %p74 = scmp.ne.s32.totalorder %s63, %s66
      %p75 = scmp.eq.s32.totalorder %s44, 3
      %p76 = por %p74, %p75
      %p77 = scmp.ne.s32.totalorder %s66, %s67
      %p78 = scmp.eq.s32.totalorder %s44, 0
      %p79 = por %p77, %p78
      %p80 = scmp.ne.s32.totalorder %s66, %s67
      %p81 = scmp.eq.s32.totalorder %s45, 3
      %p82 = por %p80, %p81
      %p84 = scmp.ne.s32.totalorder %s67, %s83
      %p85 = scmp.eq.s32.totalorder %s45, 0
      %p86 = por %p84, %p85
      %s87 = ssub.s32 %s46, %s58
      %p88 = scmp.eq.s32.totalorder %s87, 0
      %s90 = sadd.s32 %s89, 1
      %s91 = scalar_select %p88, %s89, %s90
      %p94 = pneg %p88
      %p95 = scmp.eq.s32.totalorder %s39, 3
      %p96 = por %p94, %p95
      %p97 = scmp.ne.s32.totalorder %s89, %s92
      %p98 = scmp.eq.s32.totalorder %s39, 0
      %p99 = por %p97, %p98
      %p100 = scmp.ne.s32.totalorder %s89, %s92
      %p101 = scmp.eq.s32.totalorder %s44, 3
      %p102 = por %p100, %p101
      %p103 = scmp.ne.s32.totalorder %s92, %s93
      %p104 = scmp.eq.s32.totalorder %s44, 0
      %p105 = por %p103, %p104
      %p106 = scmp.ne.s32.totalorder %s92, %s93
      %p107 = scmp.eq.s32.totalorder %s45, 3
      %p108 = por %p106, %p107
      %p110 = scmp.ne.s32.totalorder %s93, %s109
      %p111 = scmp.eq.s32.totalorder %s45, 0
      %p112 = por %p110, %p111
      %s114 = sadd.s32 %s113, 1
      %p117 = scmp.eq.s32.totalorder %s39, 3
      %p118 = scmp.ne.s32.totalorder %s113, %s115
      %p119 = scmp.eq.s32.totalorder %s39, 0
      %p120 = por %p118, %p119
      %p121 = scmp.ne.s32.totalorder %s113, %s115
      %p122 = scmp.eq.s32.totalorder %s44, 3
      %p123 = por %p121, %p122
      %p124 = scmp.ne.s32.totalorder %s115, %s116
      %p125 = scmp.eq.s32.totalorder %s44, 0
      %p126 = por %p124, %p125
      %p127 = scmp.ne.s32.totalorder %s115, %s116
      %p128 = scmp.eq.s32.totalorder %s45, 3
      %p129 = por %p127, %p128
      %p131 = scmp.ne.s32.totalorder %s116, %s130
      %p132 = scmp.eq.s32.totalorder %s45, 0
      %p133 = por %p131, %p132
      %s135 = sadd.s32 %s134, 1
      %p138 = scmp.eq.s32.totalorder %s39, 3
      %p139 = scmp.ne.s32.totalorder %s134, %s136
      %p140 = scmp.eq.s32.totalorder %s39, 0
      %p141 = por %p139, %p140
      %p142 = scmp.ne.s32.totalorder %s134, %s136
      %p143 = scmp.eq.s32.totalorder %s44, 3
      %p144 = por %p142, %p143
      %p145 = scmp.ne.s32.totalorder %s136, %s137
      %p146 = scmp.eq.s32.totalorder %s44, 0
      %p147 = por %p145, %p146
      %p148 = scmp.ne.s32.totalorder %s136, %s137
      %p149 = scmp.eq.s32.totalorder %s45, 3
      %p150 = por %p148, %p149
      %p152 = scmp.ne.s32.totalorder %s137, %s151
      %p153 = scmp.eq.s32.totalorder %s45, 0
      %p154 = por %p152, %p153
      %s156 = sadd.s32 %s155, 1
      %p159 = scmp.eq.s32.totalorder %s39, 3
      %p160 = scmp.ne.s32.totalorder %s155, %s157
      %p161 = scmp.eq.s32.totalorder %s39, 0
      %p162 = por %p160, %p161
      %p163 = scmp.ne.s32.totalorder %s155, %s157
      %p164 = scmp.eq.s32.totalorder %s44, 3
      %p165 = por %p163, %p164
      %p166 = scmp.ne.s32.totalorder %s157, %s158
      %p167 = scmp.eq.s32.totalorder %s44, 0
      %p168 = por %p166, %p167
      %p169 = scmp.ne.s32.totalorder %s157, %s158
      %p170 = scmp.eq.s32.totalorder %s45, 3
      %p171 = por %p169, %p170
      %p173 = scmp.ne.s32.totalorder %s158, %s172
      %p174 = scmp.eq.s32.totalorder %s45, 0
      %p175 = por %p173, %p174
      %s177 = sadd.s32 %s176, 1
      %p180 = scmp.eq.s32.totalorder %s39, 3
      %p181 = scmp.ne.s32.totalorder %s176, %s178
      %p182 = scmp.eq.s32.totalorder %s39, 0
      %p183 = por %p181, %p182
      %p184 = scmp.ne.s32.totalorder %s176, %s178
      %p185 = scmp.eq.s32.totalorder %s44, 3
      %p186 = por %p184, %p185
      %p187 = scmp.ne.s32.totalorder %s178, %s179
      %p188 = scmp.eq.s32.totalorder %s44, 0
      %p189 = por %p187, %p188
      %p190 = scmp.ne.s32.totalorder %s178, %s179
      %p191 = scmp.eq.s32.totalorder %s45, 3
      %p192 = por %p190, %p191
      %p194 = scmp.ne.s32.totalorder %s179, %s193
      %p195 = scmp.eq.s32.totalorder %s45, 0
      %p196 = por %p194, %p195
      %s198 = sadd.s32 %s197, 1
      %p201 = scmp.eq.s32.totalorder %s39, 3
      %p202 = scmp.ne.s32.totalorder %s197, %s199
      %p203 = scmp.eq.s32.totalorder %s39, 0
      %p204 = por %p202, %p203
      %p205 = scmp.ne.s32.totalorder %s197, %s199
      %p206 = scmp.eq.s32.totalorder %s44, 3
      %p207 = por %p205, %p206
      %p208 = scmp.ne.s32.totalorder %s199, %s200
      %p209 = scmp.eq.s32.totalorder %s44, 0
      %p210 = por %p208, %p209
      %p211 = scmp.ne.s32.totalorder %s199, %s200
      %p212 = scmp.eq.s32.totalorder %s45, 3
      %p213 = por %p211, %p212
      %p215 = scmp.ne.s32.totalorder %s200, %s214
      %p216 = scmp.eq.s32.totalorder %s45, 0
      %p217 = por %p215, %p216
      %s219 = sadd.s32 %s218, 1
      %p222 = scmp.eq.s32.totalorder %s39, 3
      %p223 = scmp.ne.s32.totalorder %s218, %s220
      %p224 = scmp.eq.s32.totalorder %s39, 0
      %p225 = por %p223, %p224
      %p226 = scmp.ne.s32.totalorder %s218, %s220
      %p227 = scmp.eq.s32.totalorder %s44, 3
      %p228 = por %p226, %p227
      %p229 = scmp.ne.s32.totalorder %s220, %s221
      %p230 = scmp.eq.s32.totalorder %s44, 0
      %p231 = por %p229, %p230
      %p232 = scmp.ne.s32.totalorder %s220, %s221
      %p233 = scmp.eq.s32.totalorder %s45, 3
      %p234 = por %p232, %p233
      %p236 = scmp.ne.s32.totalorder %s221, %s235
      %p237 = scmp.eq.s32.totalorder %s45, 0
      %p238 = por %p236, %p237
      %s240 = sadd.s32 %s239, 1
      %p243 = scmp.eq.s32.totalorder %s39, 3
      %p244 = scmp.ne.s32.totalorder %s239, %s241
      %p245 = scmp.eq.s32.totalorder %s39, 0
      %p246 = por %p244, %p245
      %p247 = scmp.ne.s32.totalorder %s239, %s241
      %p248 = scmp.eq.s32.totalorder %s44, 3
      %p249 = por %p247, %p248
      %p250 = scmp.ne.s32.totalorder %s241, %s242
      %p251 = scmp.eq.s32.totalorder %s44, 0
      %p252 = por %p250, %p251
      %p253 = scmp.ne.s32.totalorder %s241, %s242
      %p254 = scmp.eq.s32.totalorder %s45, 3
      %p255 = por %p253, %p254
      %p257 = scmp.ne.s32.totalorder %s242, %s256
      %p258 = scmp.eq.s32.totalorder %s45, 0
      %p259 = por %p257, %p258
      %s261 = sadd.s32 %s260, 1
      %p264 = scmp.eq.s32.totalorder %s39, 3
      %p265 = scmp.ne.s32.totalorder %s260, %s262
      %p266 = scmp.eq.s32.totalorder %s39, 0
      %p267 = por %p265, %p266
      %p268 = scmp.ne.s32.totalorder %s260, %s262
      %p269 = scmp.eq.s32.totalorder %s44, 3
      %p270 = por %p268, %p269
      %p271 = scmp.ne.s32.totalorder %s262, %s263
      %p272 = scmp.eq.s32.totalorder %s44, 0
      %p273 = por %p271, %p272
      %p274 = scmp.ne.s32.totalorder %s262, %s263
      %p275 = scmp.eq.s32.totalorder %s45, 3
      %p276 = por %p274, %p275
      %p278 = scmp.ne.s32.totalorder %s263, %s277
      %p279 = scmp.eq.s32.totalorder %s45, 0
      %p280 = por %p278, %p279
      %s282 = sadd.s32 %s281, 1
      %p285 = scmp.eq.s32.totalorder %s39, 3
      %p286 = scmp.ne.s32.totalorder %s281, %s283
      %p287 = scmp.eq.s32.totalorder %s39, 0
      %p288 = por %p286, %p287
      %p289 = scmp.ne.s32.totalorder %s281, %s283
      %p290 = scmp.eq.s32.totalorder %s44, 3
      %p291 = por %p289, %p290
      %p292 = scmp.ne.s32.totalorder %s283, %s284
      %p293 = scmp.eq.s32.totalorder %s44, 0
      %p294 = por %p292, %p293
      %p295 = scmp.ne.s32.totalorder %s283, %s284
      %p296 = scmp.eq.s32.totalorder %s45, 3
      %p297 = por %p295, %p296
      %p299 = scmp.ne.s32.totalorder %s284, %s298
      %p300 = scmp.eq.s32.totalorder %s45, 0
      %p301 = por %p299, %p300
      %s303 = sadd.s32 %s302, 1
      %p306 = scmp.eq.s32.totalorder %s39, 3
      %p307 = scmp.ne.s32.totalorder %s302, %s304
      %p308 = scmp.eq.s32.totalorder %s39, 0
      %p309 = por %p307, %p308
      %p310 = scmp.ne.s32.totalorder %s302, %s304
      %p311 = scmp.eq.s32.totalorder %s44, 3
      %p312 = por %p310, %p311
      %p313 = scmp.ne.s32.totalorder %s304, %s305
      %p314 = scmp.eq.s32.totalorder %s44, 0
      %p315 = por %p313, %p314
      %p316 = scmp.ne.s32.totalorder %s304, %s305
      %p317 = scmp.eq.s32.totalorder %s45, 3
      %p318 = por %p316, %p317
      %p320 = scmp.ne.s32.totalorder %s305, %s319
      %p321 = scmp.eq.s32.totalorder %s45, 0
      %p322 = por %p320, %p321
      %s324 = sadd.s32 %s323, 1
      %p327 = scmp.eq.s32.totalorder %s39, 3
      %p328 = scmp.ne.s32.totalorder %s323, %s325
      %p329 = scmp.eq.s32.totalorder %s39, 0
      %p330 = por %p328, %p329
      %p331 = scmp.ne.s32.totalorder %s323, %s325
      %p332 = scmp.eq.s32.totalorder %s44, 3
      %p333 = por %p331, %p332
      %p334 = scmp.ne.s32.totalorder %s325, %s326
      %p335 = scmp.eq.s32.totalorder %s44, 0
      %p336 = por %p334, %p335
      %p337 = scmp.ne.s32.totalorder %s325, %s326
      %p338 = scmp.eq.s32.totalorder %s45, 3
      %p339 = por %p337, %p338
      %p341 = scmp.ne.s32.totalorder %s326, %s340
      %p342 = scmp.eq.s32.totalorder %s45, 0
      %p343 = por %p341, %p342
      %s345 = sadd.s32 %s344, 1
      %p348 = scmp.eq.s32.totalorder %s39, 3
      %p349 = scmp.ne.s32.totalorder %s344, %s346
      %p350 = scmp.eq.s32.totalorder %s39, 0
      %p351 = por %p349, %p350
      %p352 = scmp.ne.s32.totalorder %s344, %s346
      %p353 = scmp.eq.s32.totalorder %s44, 3
      %p354 = por %p352, %p353
      %p355 = scmp.ne.s32.totalorder %s346, %s347
      %p356 = scmp.eq.s32.totalorder %s44, 0
      %p357 = por %p355, %p356
      %p358 = scmp.ne.s32.totalorder %s346, %s347
      %p359 = scmp.eq.s32.totalorder %s45, 3
      %p360 = por %p358, %p359
      %p362 = scmp.ne.s32.totalorder %s347, %s361
      %p363 = scmp.eq.s32.totalorder %s45, 0
      %p364 = por %p362, %p363
      %s366 = sadd.s32 %s365, 1
      %p369 = scmp.eq.s32.totalorder %s39, 3
      %p370 = scmp.ne.s32.totalorder %s365, %s367
      %p371 = scmp.eq.s32.totalorder %s39, 0
      %p372 = por %p370, %p371
      %p373 = scmp.ne.s32.totalorder %s365, %s367
      %p374 = scmp.eq.s32.totalorder %s44, 3
      %p375 = por %p373, %p374
      %p376 = scmp.ne.s32.totalorder %s367, %s368
      %p377 = scmp.eq.s32.totalorder %s44, 0
      %p378 = por %p376, %p377
      %p379 = scmp.ne.s32.totalorder %s367, %s368
      %p380 = scmp.eq.s32.totalorder %s45, 3
      %p381 = por %p379, %p380
      %p383 = scmp.ne.s32.totalorder %s368, %s382
      %p384 = scmp.eq.s32.totalorder %s45, 0
      %p385 = por %p383, %p384
      %s387 = sadd.s32 %s386, 1
      %p390 = scmp.eq.s32.totalorder %s39, 3
      %p391 = scmp.ne.s32.totalorder %s386, %s388
      %p392 = scmp.eq.s32.totalorder %s39, 0
      %p393 = por %p391, %p392
      %p394 = scmp.ne.s32.totalorder %s386, %s388
      %p395 = scmp.eq.s32.totalorder %s44, 3
      %p396 = por %p394, %p395
      %p397 = scmp.ne.s32.totalorder %s388, %s389
      %p398 = scmp.eq.s32.totalorder %s44, 0
      %p399 = por %p397, %p398
      %p400 = scmp.ne.s32.totalorder %s388, %s389
      %p401 = scmp.eq.s32.totalorder %s45, 3
      %p402 = por %p400, %p401
      %p404 = scmp.ne.s32.totalorder %s389, %s403
      %p405 = scmp.eq.s32.totalorder %s45, 0
      %p406 = por %p404, %p405
      %s408 = sadd.s32 %s407, 1
      %p411 = scmp.eq.s32.totalorder %s39, 3
      %p412 = scmp.ne.s32.totalorder %s407, %s409
      %p413 = scmp.eq.s32.totalorder %s39, 0
      %p414 = por %p412, %p413
      %p415 = scmp.ne.s32.totalorder %s407, %s409
      %p416 = scmp.eq.s32.totalorder %s44, 3
      %p417 = por %p415, %p416
      %p418 = scmp.ne.s32.totalorder %s409, %s410
      %p419 = scmp.eq.s32.totalorder %s44, 0
      %p420 = por %p418, %p419
      %p421 = scmp.ne.s32.totalorder %s409, %s410
      %p422 = scmp.eq.s32.totalorder %s45, 3
      %p423 = por %p421, %p422
      %p425 = scmp.ne.s32.totalorder %s410, %s424
      %p426 = scmp.eq.s32.totalorder %s45, 0
      %p427 = por %p425, %p426
      %s429 = sadd.s32 %s428, 1
      %p432 = scmp.eq.s32.totalorder %s39, 3
      %p433 = scmp.ne.s32.totalorder %s428, %s430
      %p434 = scmp.eq.s32.totalorder %s39, 0
      %p435 = por %p433, %p434
      %p436 = scmp.ne.s32.totalorder %s428, %s430
      %p437 = scmp.eq.s32.totalorder %s44, 3
      %p438 = por %p436, %p437
      %p439 = scmp.ne.s32.totalorder %s430, %s431
      %p440 = scmp.eq.s32.totalorder %s44, 0
      %p441 = por %p439, %p440
      %p442 = scmp.ne.s32.totalorder %s430, %s431
      %p443 = scmp.eq.s32.totalorder %s45, 3
      %p444 = por %p442, %p443
      %p446 = scmp.ne.s32.totalorder %s431, %s445
      %p447 = scmp.eq.s32.totalorder %s45, 0
      %p448 = por %p446, %p447
      %s449 = ssub.s32 %s46, %s58
      %s450 = ssub.s32 %s47, %s54
      %s451 = sor.u32 %s449, %s450
      %p452 = scmp.eq.s32.totalorder %s451, 0
      %s454 = sadd.s32 %s453, 1
      %s455 = scalar_select %p452, %s453, %s454
      %p458 = pneg %p452
      %p459 = scmp.eq.s32.totalorder %s39, 3
      %p460 = por %p458, %p459
      %p461 = scmp.ne.s32.totalorder %s453, %s456
      %p462 = scmp.eq.s32.totalorder %s39, 0
      %p463 = por %p461, %p462
      %p464 = scmp.ne.s32.totalorder %s453, %s456
      %p465 = scmp.eq.s32.totalorder %s44, 3
      %p466 = por %p464, %p465
      %p467 = scmp.ne.s32.totalorder %s456, %s457
      %p468 = scmp.eq.s32.totalorder %s44, 0
      %p469 = por %p467, %p468
      %p470 = scmp.ne.s32.totalorder %s456, %s457
      %p471 = scmp.eq.s32.totalorder %s45, 3
      %p472 = por %p470, %p471
      %p474 = scmp.ne.s32.totalorder %s457, %s473
      %p475 = scmp.eq.s32.totalorder %s45, 0
      %p476 = por %p474, %p475
      %p477 = scmp.le.s32.totalorder 1, %s39
      %p478 = scmp.lt.s32.totalorder %s39, 5
      %p479 = pnand %p477, %p478
      %p480 = pneg %p479
      // Predicated region
      $region9: #{tpu_custom_call.1} parent=5 // pred_check
        _
      $region10: #{tpu_custom_call.1} parent=5 // pred_check_branch
        %482 = sbr.rel (%p479) target = $region12
      $region11: #{tpu_custom_call.1} parent=5 // pred_region
        %s483 = ssub.s32 %s39, 1
        // Predicated region
        $region13: #{tpu_custom_call.1} parent=11 // pred_check
          %p484 = pneg %p126
        $region14: #{tpu_custom_call.1} parent=11 // pred_check_branch
          %486 = sbr.rel (%p484) target = $region16
        $region15: #{tpu_custom_call.1} parent=11 // pred_region
          _
        $region16: #{tpu_custom_call.1} parent=11 // pred_fallthru
          _
        // Predicated region
        $region17: #{tpu_custom_call.1} parent=11 // pred_check
          %p487 = pneg %p147
        $region18: #{tpu_custom_call.1} parent=11 // pred_check_branch
          %489 = sbr.rel (%p487) target = $region20
        $region19: #{tpu_custom_call.1} parent=11 // pred_region
          _
        $region20: #{tpu_custom_call.1} parent=11 // pred_fallthru
          _
        // Predicated region
        $region21: #{tpu_custom_call.1} parent=11 // pred_check
          %p490 = pneg %p168
        $region22: #{tpu_custom_call.1} parent=11 // pred_check_branch
          %492 = sbr.rel (%p490) target = $region24
        $region23: #{tpu_custom_call.1} parent=11 // pred_region
          %494 = vsyncadd [#allocation6], 0
          %s495 = sshll.u32 %s5, 4
          %s496 = int_to_ptr.hbm [resolvable:$true] %s495
          %s497 = sshll.u32 [#allocation5], 4
          %s498 = int_to_ptr.vmem [resolvable:$true] %s497
          %503 = dma.hbm_to_vmem [thread:$0]  %s496, 512, %s498, [#allocation6], 128, 128, 8
        $region24: #{tpu_custom_call.1} parent=11 // pred_fallthru
          _
        // Predicated region
        $region25: #{tpu_custom_call.1} parent=11 // pred_check
          %p504 = pneg %p189
        $region26: #{tpu_custom_call.1} parent=11 // pred_check_branch
          %506 = sbr.rel (%p504) target = $region28
        $region27: #{tpu_custom_call.1} parent=11 // pred_region
          _
        $region28: #{tpu_custom_call.1} parent=11 // pred_fallthru
          _
        // Predicated region
        $region29: #{tpu_custom_call.1} parent=11 // pred_check
          %p507 = pneg %p210
        $region30: #{tpu_custom_call.1} parent=11 // pred_check_branch
          %509 = sbr.rel (%p507) target = $region32
        $region31: #{tpu_custom_call.1} parent=11 // pred_region
          %511 = vsyncadd [#allocation9], 0
          %s512 = sshll.u32 %s7, 4
          %s513 = int_to_ptr.hbm [resolvable:$true] %s512
          %s514 = sshll.u32 [#allocation8], 4
          %s515 = int_to_ptr.vmem [resolvable:$true] %s514
          %520 = dma.hbm_to_vmem [thread:$0]  %s513, 512, %s515, [#allocation9], 128, 128, 8
        $region32: #{tpu_custom_call.1} parent=11 // pred_fallthru
          _
        // Predicated region
        $region33: #{tpu_custom_call.1} parent=11 // pred_check
          %p521 = pneg %p231
        $region34: #{tpu_custom_call.1} parent=11 // pred_check_branch
          %523 = sbr.rel (%p521) target = $region36
        $region35: #{tpu_custom_call.1} parent=11 // pred_region
          _
        $region36: #{tpu_custom_call.1} parent=11 // pred_fallthru
          _
        // Predicated region
        $region37: #{tpu_custom_call.1} parent=11 // pred_check
          %p524 = pneg %p252
        $region38: #{tpu_custom_call.1} parent=11 // pred_check_branch
          %526 = sbr.rel (%p524) target = $region40
        $region39: #{tpu_custom_call.1} parent=11 // pred_region
          _
        $region40: #{tpu_custom_call.1} parent=11 // pred_fallthru
          _
        // Predicated region
        $region41: #{tpu_custom_call.1} parent=11 // pred_check
          %p527 = pneg %p273
        $region42: #{tpu_custom_call.1} parent=11 // pred_check_branch
          %529 = sbr.rel (%p527) target = $region44
        $region43: #{tpu_custom_call.1} parent=11 // pred_region
          _
        $region44: #{tpu_custom_call.1} parent=11 // pred_fallthru
          _
        // Predicated region
        $region45: #{tpu_custom_call.1} parent=11 // pred_check
          %p530 = pneg %p294
        $region46: #{tpu_custom_call.1} parent=11 // pred_check_branch
          %532 = sbr.rel (%p530) target = $region48
        $region47: #{tpu_custom_call.1} parent=11 // pred_region
          %534 = vsyncadd [#allocation9], 0
          %s535 = sshll.u32 %s11, 4
          %s536 = int_to_ptr.hbm [resolvable:$true] %s535
          %s537 = sshll.u32 [#allocation10], 4
          %s538 = int_to_ptr.vmem [resolvable:$true] %s537
          %543 = dma.hbm_to_vmem [thread:$0]  %s536, 512, %s538, [#allocation9], 128, 128, 8
        $region48: #{tpu_custom_call.1} parent=11 // pred_fallthru
          _
        // Predicated region
        $region49: #{tpu_custom_call.1} parent=11 // pred_check
          %p544 = pneg %p315
        $region50: #{tpu_custom_call.1} parent=11 // pred_check_branch
          %546 = sbr.rel (%p544) target = $region52
        $region51: #{tpu_custom_call.1} parent=11 // pred_region
          _
        $region52: #{tpu_custom_call.1} parent=11 // pred_fallthru
          _
        // Predicated region
        $region53: #{tpu_custom_call.1} parent=11 // pred_check
          %p547 = pneg %p336
        $region54: #{tpu_custom_call.1} parent=11 // pred_check_branch
          %549 = sbr.rel (%p547) target = $region56
        $region55: #{tpu_custom_call.1} parent=11 // pred_region
          _
        $region56: #{tpu_custom_call.1} parent=11 // pred_fallthru
          _
        // Predicated region
        $region57: #{tpu_custom_call.1} parent=11 // pred_check
          %p550 = pneg %p357
        $region58: #{tpu_custom_call.1} parent=11 // pred_check_branch
          %552 = sbr.rel (%p550) target = $region60
        $region59: #{tpu_custom_call.1} parent=11 // pred_region
          _
        $region60: #{tpu_custom_call.1} parent=11 // pred_fallthru
          _
        // Predicated region
        $region61: #{tpu_custom_call.1} parent=11 // pred_check
          %p553 = pneg %p378
        $region62: #{tpu_custom_call.1} parent=11 // pred_check_branch
          %555 = sbr.rel (%p553) target = $region64
        $region63: #{tpu_custom_call.1} parent=11 // pred_region
          _
        $region64: #{tpu_custom_call.1} parent=11 // pred_fallthru
          _
        // Predicated region
        $region65: #{tpu_custom_call.1} parent=11 // pred_check
          %p556 = pneg %p399
        $region66: #{tpu_custom_call.1} parent=11 // pred_check_branch
          %558 = sbr.rel (%p556) target = $region68
        $region67: #{tpu_custom_call.1} parent=11 // pred_region
          _
        $region68: #{tpu_custom_call.1} parent=11 // pred_fallthru
          _
        // Predicated region
        $region69: #{tpu_custom_call.1} parent=11 // pred_check
          %p559 = pneg %p420
        $region70: #{tpu_custom_call.1} parent=11 // pred_check_branch
          %561 = sbr.rel (%p559) target = $region72
        $region71: #{tpu_custom_call.1} parent=11 // pred_region
          %563 = vsyncadd [#allocation12], 0
          %s564 = sshll.u32 %s17, 4
          %s565 = int_to_ptr.hbm [resolvable:$true] %s564
          %s566 = sshll.u32 [#allocation11], 4
          %s567 = int_to_ptr.vmem [resolvable:$true] %s566
          %572 = dma.hbm_to_vmem [thread:$0]  %s565, 512, %s567, [#allocation12], 128, 128, 8
        $region72: #{tpu_custom_call.1} parent=11 // pred_fallthru
          _
        // Predicated region
        $region73: #{tpu_custom_call.1} parent=11 // pred_check
          %p573 = pneg %p441
        $region74: #{tpu_custom_call.1} parent=11 // pred_check_branch
          %575 = sbr.rel (%p573) target = $region76
        $region75: #{tpu_custom_call.1} parent=11 // pred_region
          _
        $region76: #{tpu_custom_call.1} parent=11 // pred_fallthru
          _
      $region12: #{tpu_custom_call.1} parent=5 // pred_fallthru
        _
      %p576 = scmp.lt.s32.totalorder %s39, 4
      // Predicated region
      $region77: #{tpu_custom_call.1} parent=5 // pred_check
        %p577 = pneg %p576
      $region78: #{tpu_custom_call.1} parent=5 // pred_check_branch
        %579 = sbr.rel (%p577) target = $region80
      $region79: #{tpu_custom_call.1} parent=5 // pred_region
        // Predicated region
        $region81: #{tpu_custom_call.1} parent=79 // pred_check
          %p580 = pneg %p73
        $region82: #{tpu_custom_call.1} parent=79 // pred_check_branch
          %582 = sbr.rel (%p580) target = $region84
        $region83: #{tpu_custom_call.1} parent=79 // pred_region
          %p583 = scmp.lt.s32.totalorder %s46, 1
          %s584 = scalar_select %p583, %s46, 1
          %p585 = scmp.lt.s32.totalorder %s47, 1
          %s586 = scalar_select %p585, %s47, 1
          %s587 = smul.addr %s584, 2
          %s588 = sadd.s32 %s586, %s587
          %s589 = smul.addr %s588, 8
          %s590 = scalar_lea.vmem %s1, %s589
        $region84: #{tpu_custom_call.1} parent=79 // pred_fallthru
          _
        // Predicated region
        $region85: #{tpu_custom_call.1} parent=79 // pred_check
          %p591 = pneg %p99
        $region86: #{tpu_custom_call.1} parent=79 // pred_check_branch
          %593 = sbr.rel (%p591) target = $region88
        $region87: #{tpu_custom_call.1} parent=79 // pred_region
          %p594 = scmp.lt.s32.totalorder %s46, 1
          %s595 = scalar_select %p594, %s46, 1
          %s596 = smul.addr %s595, 2
          %s597 = smul.addr %s596, 8
          %s598 = scalar_lea.vmem %s2, %s597
        $region88: #{tpu_custom_call.1} parent=79 // pred_fallthru
          _
      $region80: #{tpu_custom_call.1} parent=5 // pred_fallthru
        _
      %p599 = scmp.le.s32.totalorder 1, %s39
      %p600 = scmp.lt.s32.totalorder %s39, 5
      %p601 = pnand %p599, %p600
      %p602 = pneg %p601
      // Predicated region
      $region89: #{tpu_custom_call.1} parent=5 // pred_check
        _
      $region90: #{tpu_custom_call.1} parent=5 // pred_check_branch
        %604 = sbr.rel (%p601) target = $region92
      $region91: #{tpu_custom_call.1} parent=5 // pred_region
        %s605 = ssub.s32 %s39, 1
        // Predicated region
        $region93: #{tpu_custom_call.1} parent=91 // pred_check
          %p606 = pneg %p168
        $region94: #{tpu_custom_call.1} parent=91 // pred_check_branch
          %608 = sbr.rel (%p606) target = $region96
        $region95: #{tpu_custom_call.1} parent=91 // pred_region
          %610 = dma.done [#allocation6], 512
        $region96: #{tpu_custom_call.1} parent=91 // pred_fallthru
          _
        // Predicated region
        $region97: #{tpu_custom_call.1} parent=91 // pred_check
          %p611 = pneg %p210
        $region98: #{tpu_custom_call.1} parent=91 // pred_check_branch
          %613 = sbr.rel (%p611) target = $region100
        $region99: #{tpu_custom_call.1} parent=91 // pred_region
          %615 = dma.done [#allocation9], 512
        $region100: #{tpu_custom_call.1} parent=91 // pred_fallthru
          _
        // Predicated region
        $region101: #{tpu_custom_call.1} parent=91 // pred_check
          %p616 = pneg %p294
        $region102: #{tpu_custom_call.1} parent=91 // pred_check_branch
          %618 = sbr.rel (%p616) target = $region104
        $region103: #{tpu_custom_call.1} parent=91 // pred_region
          %620 = dma.done [#allocation9], 512
        $region104: #{tpu_custom_call.1} parent=91 // pred_fallthru
          _
        // Predicated region
        $region105: #{tpu_custom_call.1} parent=91 // pred_check
          %p621 = pneg %p420
        $region106: #{tpu_custom_call.1} parent=91 // pred_check_branch
          %623 = sbr.rel (%p621) target = $region108
        $region107: #{tpu_custom_call.1} parent=91 // pred_region
          %625 = dma.done [#allocation12], 512
        $region108: #{tpu_custom_call.1} parent=91 // pred_fallthru
          _
        %p626 = scmp.lt.s32.totalorder %s48, 1
        %s627 = scalar_select %p626, %s48, 1
        %p628 = scmp.lt.s32.totalorder %s49, 1
        %s629 = scalar_select %p628, %s49, 1
        %s630 = smul.addr %s627, 2
        %s631 = sadd.s32 %s629, %s630
        %s632 = smul.addr %s631, 8
        %s633 = scalar_lea.vmem %s1, %s632
        %p634 = pneg %p79
        %p635 = pneg %p76
        %p636 = scmp.lt.s32.totalorder %s48, 1
        %s637 = scalar_select %p636, %s48, 1
        %s638 = smul.addr %s637, 2
        %s639 = smul.addr %s638, 8
        %s640 = scalar_lea.vmem %s2, %s639
        %p641 = pneg %p105
        %p642 = pneg %p102
        %p643 = pneg %p126
        %p644 = pneg %p123
        %p645 = pneg %p147
        %p646 = pneg %p144
        %p647 = pneg %p168
        %p648 = pneg %p165
        %p649 = pneg %p189
        %p650 = pneg %p186
        %p651 = pneg %p210
        %p652 = pneg %p207
        %p653 = pneg %p231
        %p654 = pneg %p228
        %p655 = pneg %p252
        %p656 = pneg %p249
        %p657 = pneg %p273
        %p658 = pneg %p270
        %p659 = pneg %p294
        %p660 = pneg %p291
        %p661 = pneg %p315
        %p662 = pneg %p312
        %p663 = pneg %p336
        %p664 = pneg %p333
        %p665 = pneg %p357
        %p666 = pneg %p354
        %p667 = pneg %p378
        %p668 = pneg %p375
        %p669 = pneg %p399
        %p670 = pneg %p396
        %p671 = pneg %p420
        %p672 = pneg %p417
        %p673 = pneg %p441
        %p674 = pneg %p438
        %p675 = pneg %p469
        %p676 = pneg %p466
        %s677 = sand.u32 %s456, 1
        %s678 = scalar_lea.sflag [#allocation7], %s677
        %s679 = sand.u32 %s456, 1
        %s680 = smul.addr %s679, 8
        %s681 = scalar_lea.vmem [#allocation13], %s680
        %p682 = scmp.lt.s32.totalorder %s48, 1
        %s683 = scalar_select %p682, %s48, 1
        %p684 = scmp.lt.s32.totalorder %s49, 1
        %s685 = scalar_select %p684, %s49, 1
        %s686 = smul.addr %s683, 2
        %s687 = sadd.s32 %s685, %s686
        %s688 = smul.addr %s687, 8
        %s689 = scalar_lea.vmem %s1, %s688
        %p690 = scmp.lt.s32.totalorder %s48, 1
        %s691 = scalar_select %p690, %s48, 1
        %s692 = smul.addr %s691, 2
        %s693 = smul.addr %s692, 8
        %s694 = scalar_lea.vmem %s2, %s693
        %v695 = vld [vmem:[%s689] sm:$0xff]
        %s696 = smul.u32 %s48, 128
        %s697 = sld [smem:[#allocation4 + %s696]]
        %p698 = scmp.lt.s32.totalorder %s697, 8
        %s699 = scalar_select %p698, %s697, 8
        %v700 = vlaneseq
        %v701 = vand.u32 %v700, 127
        %vm702 = vcmp.ge.s32.totalorder %v701, 1
        %v703 = vstv %s699
        %vm704 = vcmp.le.s32.totalorder %v701, %v703
        %vm705 = vmand %vm702, %vm704
        %v706 = vsel %vm705, 0.0, -10000.0
        %v707 = vld [vmem:[%s3] sm:$0xff]
        %v708 = vld [vmem:[%s3 + $0x8] sm:$0xff]
        %v709 = vld [vmem:[%s3 + $0x10] sm:$0xff]
        %v710 = vld [vmem:[%s3 + $0x18] sm:$0xff]
        %v711 = vld [vmem:[%s4] sm:$0x1]
        %v713 = vperm.slane %v711, 0
        %vm715 = vcmask 261120
        %v717 = vsel %vm715, %v695, 0
        %719 = vmatpush.msra.mxu0 0.0
        %720 = vmatpush.msra.mxu0 0.0
        %721 = vmatpush.msra.mxu0 0.0
        %722 = vmatpush.msra.mxu0 0.0
        %723 = vmatpush.msra.mxu0 0.0
        %724 = vmatpush.msra.mxu0 0.0
        %725 = vmatpush.msra.mxu0 0.0
        %726 = vmatpush.msra.mxu0 0.0
        %727 = vmatpush.msra.mxu0 0.0
        %728 = vmatpush.msra.mxu0 0.0
        %729 = vmatpush.msra.mxu0 0.0
        %730 = vmatpush.msra.mxu0 0.0
        %731 = vmatpush.msra.mxu0 %v710
        %732 = vmatpush.msra.mxu0 %v709
        %733 = vmatpush.msra.mxu0 %v708
        %734 = vmatpush.msra.mxu0 %v707
        %735 = vmatmul.f32.gmra.mxu0 %v717
        %v736 = vpop.f32.mrf.mxu0
        %v737 = vadd.f32 %v713, %v736
        %738 = vdwg.mxu0
        %v739 = vld [vmem:[%s694] sm:$0xff]
        %v740 = vld [vmem:[%s694 + $0x8] sm:$0xff]
        %v741 = vld [vmem:[#allocation5] sm:$0xff]
        %v742 = vld [vmem:[#allocation5 + $0x8] sm:$0xff]
        %v743 = vld [vmem:[#allocation5 + $0x10] sm:$0xff]
        %v744 = vld [vmem:[#allocation5 + $0x18] sm:$0xff]
        %v745 = vld [vmem:[%s6] sm:$0x1]
        %v747 = vperm.slane %v745, 0
        %v750 = vsel %vm715, %v739, 0
        %v753 = vsel %vm715, %v740, 0
        %755 = vmatpush.msra.mxu0 0.0
        %756 = vmatpush.msra.mxu0 0.0
        %757 = vmatpush.msra.mxu0 0.0
        %758 = vmatpush.msra.mxu0 0.0
        %759 = vmatpush.msra.mxu0 0.0
        %760 = vmatpush.msra.mxu0 0.0
        %761 = vmatpush.msra.mxu0 0.0
        %762 = vmatpush.msra.mxu0 0.0
        %763 = vmatpush.msra.mxu0 0.0
        %764 = vmatpush.msra.mxu0 0.0
        %765 = vmatpush.msra.mxu0 0.0
        %766 = vmatpush.msra.mxu0 0.0
        %767 = vmatpush.msra.mxu0 %v744
        %768 = vmatpush.msra.mxu0 %v743
        %769 = vmatpush.msra.mxu0 %v742
        %770 = vmatpush.msra.mxu0 %v741
        %771 = vmatmul.f32.gmra.mxu0 %v750
        %v772 = vpop.f32.mrf.mxu0
        %v773 = vadd.f32 %v747, %v772
        %774 = vmatmul.f32.gmra.mxu0 %v753
        %v775 = vpop.f32.mrf.mxu0
        %v776 = vadd.f32 %v747, %v775
        %777 = vdwg.mxu0
        %vm778 = vcmask 64512
        %v780 = vsel %vm778, %v737, 0
        %v783 = vsel %vm778, %v773, 0
        %v786 = vsel %vm778, %v776, 0
        %788 = vmatpush.xpose.msra.mxu0 0.0
        %789 = vmatpush.xpose.msra.mxu0 0.0
        %790 = vmatpush.xpose.msra.mxu0 0.0
        %791 = vmatpush.xpose.msra.mxu0 0.0
        %792 = vmatpush.xpose.msra.mxu0 0.0
        %793 = vmatpush.xpose.msra.mxu0 0.0
        %794 = vmatpush.xpose.msra.mxu0 0.0
        %795 = vmatpush.xpose.msra.mxu0 0.0
        %796 = vmatpush.xpose.msra.mxu0 0.0
        %797 = vmatpush.xpose.msra.mxu0 0.0
        %798 = vmatpush.xpose.msra.mxu0 0.0
        %799 = vmatpush.xpose.msra.mxu0 0.0
        %800 = vmatpush.xpose.msra.mxu0 0.0
        %801 = vmatpush.xpose.msra.mxu0 0.0
        %802 = vmatpush.xpose.msra.mxu0 %v786
        %803 = vmatpush.xpose.msra.mxu0 %v783
        %804 = vmatmul.f32.gmra.mxu0 %v780
        %v805 = vpop.f32.mrf.mxu0
        %v806 = vadd.f32 %v706, %v805
        %807 = vdwg.mxu0
        %vm808 = vcmask 130048
        %v809 = vsel %vm808, %v806, -inf
        %810 = vmax.xlane.f32.xlu0 %v809
        %v811 = vpop.xlane.xlu0 %810
        %v812 = vsub.f32 %v806, %v811
        %v813 = vmul.f32 %v812, 1.442695
        %v814 = vpow.pop %v813
        %v815 = vsel %vm808, %v814, 0.0
        %816 = vadd.xlane.f32.xlu0 %v815
        %v817 = vpop.xlane.xlu0 %816
        %v818 = vrcp.pop %v817
        %v819 = vmul.f32 %v814, %v818
        %820 = vrot.lane.b32.xlu0 %v773, 96
        %v821 = vpop.permute.xlu0 %820
        %822 = vrot.lane.b32.xlu0 %v776, 96
        %v823 = vpop.permute.xlu0 %822
        %v827 = vsel %vm808, %v819, 0
        %829 = vmatpush.msra.mxu0 0.0
        %830 = vmatpush.msra.mxu0 0.0
        %831 = vmatpush.msra.mxu0 0.0
        %832 = vmatpush.msra.mxu0 0.0
        %833 = vmatpush.msra.mxu0 0.0
        %834 = vmatpush.msra.mxu0 0.0
        %835 = vmatpush.msra.mxu0 0.0
        %836 = vmatpush.msra.mxu0 0.0
        %837 = vmatpush.msra.mxu0 0.0
        %838 = vmatpush.msra.mxu0 0.0
        %839 = vmatpush.msra.mxu0 0.0
        %840 = vmatpush.msra.mxu0 0.0
        %841 = vmatpush.msra.mxu0 0.0
        %842 = vmatpush.msra.mxu0 0.0
        %843 = vmatpush.msra.mxu0 %v823
        %844 = vmatpush.msra.mxu0 %v821
        %845 = vmatmul.f32.gmra.mxu0 %v827
        %v846 = vpop.f32.mrf.mxu0
        %v847 = vadd.f32 0.0, %v846
        %848 = vdwg.mxu0
        %849 = vst.msk [vmem:[#allocation2] sm:$0xff] %vm778, %v847
        %850 = vrot.lane.b32.xlu0 %v737, 120
        %v851 = vpop.permute.xlu0 %850
        %852 = vrot.lane.b32.xlu0 %v773, 120
        %v853 = vpop.permute.xlu0 %852
        %854 = vrot.lane.b32.xlu0 %v776, 120
        %v855 = vpop.permute.xlu0 %854
        %v856 = vsel %vm778, %v851, 0
        %v858 = vsel %vm778, %v853, 0
        %v860 = vsel %vm778, %v855, 0
        %862 = vmatpush.xpose.msra.mxu0 0.0
        %863 = vmatpush.xpose.msra.mxu0 0.0
        %864 = vmatpush.xpose.msra.mxu0 0.0
        %865 = vmatpush.xpose.msra.mxu0 0.0
        %866 = vmatpush.xpose.msra.mxu0 0.0
        %867 = vmatpush.xpose.msra.mxu0 0.0
        %868 = vmatpush.xpose.msra.mxu0 0.0
        %869 = vmatpush.xpose.msra.mxu0 0.0
        %870 = vmatpush.xpose.msra.mxu0 0.0
        %871 = vmatpush.xpose.msra.mxu0 0.0
        %872 = vmatpush.xpose.msra.mxu0 0.0
        %873 = vmatpush.xpose.msra.mxu0 0.0
        %874 = vmatpush.xpose.msra.mxu0 0.0
        %875 = vmatpush.xpose.msra.mxu0 0.0
        %876 = vmatpush.xpose.msra.mxu0 %v860
        %877 = vmatpush.xpose.msra.mxu0 %v858
        %878 = vmatmul.f32.gmra.mxu0 %v856
        %v879 = vpop.f32.mrf.mxu0
        %v880 = vadd.f32 %v706, %v879
        %881 = vdwg.mxu0
        %v882 = vsel %vm808, %v880, -inf
        %883 = vmax.xlane.f32.xlu0 %v882
        %v884 = vpop.xlane.xlu0 %883
        %v885 = vsub.f32 %v880, %v884
        %v886 = vmul.f32 %v885, 1.442695
        %v887 = vpow.pop %v886
        %v888 = vsel %vm808, %v887, 0.0
        %889 = vadd.xlane.f32.xlu0 %v888
        %v890 = vpop.xlane.xlu0 %889
        %v891 = vrcp.pop %v890
        %v892 = vmul.f32 %v887, %v891
        %893 = vrot.lane.b32.xlu0 %v773, 88
        %v894 = vpop.permute.xlu0 %893
        %895 = vrot.lane.b32.xlu0 %v776, 88
        %v896 = vpop.permute.xlu0 %895
        %v900 = vsel %vm808, %v892, 0
        %902 = vmatpush.msra.mxu0 0.0
        %903 = vmatpush.msra.mxu0 0.0
        %904 = vmatpush.msra.mxu0 0.0
        %905 = vmatpush.msra.mxu0 0.0
        %906 = vmatpush.msra.mxu0 0.0
        %907 = vmatpush.msra.mxu0 0.0
        %908 = vmatpush.msra.mxu0 0.0
        %909 = vmatpush.msra.mxu0 0.0
        %910 = vmatpush.msra.mxu0 0.0
        %911 = vmatpush.msra.mxu0 0.0
        %912 = vmatpush.msra.mxu0 0.0
        %913 = vmatpush.msra.mxu0 0.0
        %914 = vmatpush.msra.mxu0 0.0
        %915 = vmatpush.msra.mxu0 0.0
        %916 = vmatpush.msra.mxu0 %v896
        %917 = vmatpush.msra.mxu0 %v894
        %918 = vmatmul.f32.gmra.mxu0 %v900
        %v919 = vpop.f32.mrf.mxu0
        %v920 = vadd.f32 0.0, %v919
        %921 = vdwg.mxu0
        %923 = vrot.lane.b32.xlu0 %v920, 8
        %v924 = vpop.permute.xlu0 %923
        %vm926 = vcmask 130112
        %927 = vst.msk [vmem:[#allocation2] sm:$0xff] %vm926, %v924
        %928 = vrot.lane.b32.xlu0 %v737, 112
        %v929 = vpop.permute.xlu0 %928
        %930 = vrot.lane.b32.xlu0 %v773, 112
        %v931 = vpop.permute.xlu0 %930
        %932 = vrot.lane.b32.xlu0 %v776, 112
        %v933 = vpop.permute.xlu0 %932
        %v934 = vsel %vm778, %v929, 0
        %v936 = vsel %vm778, %v931, 0
        %v938 = vsel %vm778, %v933, 0
        %940 = vmatpush.xpose.msra.mxu0 0.0
        %941 = vmatpush.xpose.msra.mxu0 0.0
        %942 = vmatpush.xpose.msra.mxu0 0.0
        %943 = vmatpush.xpose.msra.mxu0 0.0
        %944 = vmatpush.xpose.msra.mxu0 0.0
        %945 = vmatpush.xpose.msra.mxu0 0.0
        %946 = vmatpush.xpose.msra.mxu0 0.0
        %947 = vmatpush.xpose.msra.mxu0 0.0
        %948 = vmatpush.xpose.msra.mxu0 0.0
        %949 = vmatpush.xpose.msra.mxu0 0.0
        %950 = vmatpush.xpose.msra.mxu0 0.0
        %951 = vmatpush.xpose.msra.mxu0 0.0
        %952 = vmatpush.xpose.msra.mxu0 0.0
        %953 = vmatpush.xpose.msra.mxu0 0.0
        %954 = vmatpush.xpose.msra.mxu0 %v938
        %955 = vmatpush.xpose.msra.mxu0 %v936
        %956 = vmatmul.f32.gmra.mxu0 %v934
        %v957 = vpop.f32.mrf.mxu0
        %v958 = vadd.f32 %v706, %v957
        %959 = vdwg.mxu0
        %v960 = vsel %vm808, %v958, -inf
        %961 = vmax.xlane.f32.xlu0 %v960
        %v962 = vpop.xlane.xlu0 %961
        %v963 = vsub.f32 %v958, %v962
        %v964 = vmul.f32 %v963, 1.442695
        %v965 = vpow.pop %v964
        %v966 = vsel %vm808, %v965, 0.0
        %967 = vadd.xlane.f32.xlu0 %v966
        %v968 = vpop.xlane.xlu0 %967
        %v969 = vrcp.pop %v968
        %v970 = vmul.f32 %v965, %v969
        %971 = vrot.lane.b32.xlu0 %v773, 80
        %v972 = vpop.permute.xlu0 %971
        %973 = vrot.lane.b32.xlu0 %v776, 80
        %v974 = vpop.permute.xlu0 %973
        %v978 = vsel %vm808, %v970, 0
        %980 = vmatpush.msra.mxu0 0.0
        %981 = vmatpush.msra.mxu0 0.0
        %982 = vmatpush.msra.mxu0 0.0
        %983 = vmatpush.msra.mxu0 0.0
        %984 = vmatpush.msra.mxu0 0.0
        %985 = vmatpush.msra.mxu0 0.0
        %986 = vmatpush.msra.mxu0 0.0
        %987 = vmatpush.msra.mxu0 0.0
        %988 = vmatpush.msra.mxu0 0.0
        %989 = vmatpush.msra.mxu0 0.0
        %990 = vmatpush.msra.mxu0 0.0
        %991 = vmatpush.msra.mxu0 0.0
        %992 = vmatpush.msra.mxu0 0.0
        %993 = vmatpush.msra.mxu0 0.0
        %994 = vmatpush.msra.mxu0 %v974
        %995 = vmatpush.msra.mxu0 %v972
        %996 = vmatmul.f32.gmra.mxu0 %v978
        %v997 = vpop.f32.mrf.mxu0
        %v998 = vadd.f32 0.0, %v997
        %999 = vdwg.mxu0
        %1001 = vrot.lane.b32.xlu0 %v998, 16
        %v1002 = vpop.permute.xlu0 %1001
        %vm1004 = vcmask 195712
        %1005 = vst.msk [vmem:[#allocation2] sm:$0xff] %vm1004, %v1002
        %1006 = vrot.lane.b32.xlu0 %v737, 104
        %v1007 = vpop.permute.xlu0 %1006
        %1008 = vrot.lane.b32.xlu0 %v773, 104
        %v1009 = vpop.permute.xlu0 %1008
        %1010 = vrot.lane.b32.xlu0 %v776, 104
        %v1011 = vpop.permute.xlu0 %1010
        %v1012 = vsel %vm778, %v1007, 0
        %v1014 = vsel %vm778, %v1009, 0
        %v1016 = vsel %vm778, %v1011, 0
        %1018 = vmatpush.xpose.msra.mxu0 0.0
        %1019 = vmatpush.xpose.msra.mxu0 0.0
        %1020 = vmatpush.xpose.msra.mxu0 0.0
        %1021 = vmatpush.xpose.msra.mxu0 0.0
        %1022 = vmatpush.xpose.msra.mxu0 0.0
        %1023 = vmatpush.xpose.msra.mxu0 0.0
        %1024 = vmatpush.xpose.msra.mxu0 0.0
        %1025 = vmatpush.xpose.msra.mxu0 0.0
        %1026 = vmatpush.xpose.msra.mxu0 0.0
        %1027 = vmatpush.xpose.msra.mxu0 0.0
        %1028 = vmatpush.xpose.msra.mxu0 0.0
        %1029 = vmatpush.xpose.msra.mxu0 0.0
        %1030 = vmatpush.xpose.msra.mxu0 0.0
        %1031 = vmatpush.xpose.msra.mxu0 0.0
        %1032 = vmatpush.xpose.msra.mxu0 %v1016
        %1033 = vmatpush.xpose.msra.mxu0 %v1014
        %1034 = vmatmul.f32.gmra.mxu0 %v1012
        %v1035 = vpop.f32.mrf.mxu0
        %v1036 = vadd.f32 %v706, %v1035
        %1037 = vdwg.mxu0
        %v1038 = vsel %vm808, %v1036, -inf
        %1039 = vmax.xlane.f32.xlu0 %v1038
        %v1040 = vpop.xlane.xlu0 %1039
        %v1041 = vsub.f32 %v1036, %v1040
        %v1042 = vmul.f32 %v1041, 1.442695
        %v1043 = vpow.pop %v1042
        %v1044 = vsel %vm808, %v1043, 0.0
        %1045 = vadd.xlane.f32.xlu0 %v1044
        %v1046 = vpop.xlane.xlu0 %1045
        %v1047 = vrcp.pop %v1046
        %v1048 = vmul.f32 %v1043, %v1047
        %1049 = vrot.lane.b32.xlu0 %v773, 72
        %v1050 = vpop.permute.xlu0 %1049
        %1051 = vrot.lane.b32.xlu0 %v776, 72
        %v1052 = vpop.permute.xlu0 %1051
        %v1056 = vsel %vm808, %v1048, 0
        %1058 = vmatpush.msra.mxu0 0.0
        %1059 = vmatpush.msra.mxu0 0.0
        %1060 = vmatpush.msra.mxu0 0.0
        %1061 = vmatpush.msra.mxu0 0.0
        %1062 = vmatpush.msra.mxu0 0.0
        %1063 = vmatpush.msra.mxu0 0.0
        %1064 = vmatpush.msra.mxu0 0.0
        %1065 = vmatpush.msra.mxu0 0.0
        %1066 = vmatpush.msra.mxu0 0.0
        %1067 = vmatpush.msra.mxu0 0.0
        %1068 = vmatpush.msra.mxu0 0.0
        %1069 = vmatpush.msra.mxu0 0.0
        %1070 = vmatpush.msra.mxu0 0.0
        %1071 = vmatpush.msra.mxu0 0.0
        %1072 = vmatpush.msra.mxu0 %v1052
        %1073 = vmatpush.msra.mxu0 %v1050
        %1074 = vmatmul.f32.gmra.mxu0 %v1056
        %v1075 = vpop.f32.mrf.mxu0
        %v1076 = vadd.f32 0.0, %v1075
        %1077 = vdwg.mxu0
        %1079 = vrot.lane.b32.xlu0 %v1076, 24
        %v1080 = vpop.permute.xlu0 %1079
        %vm1082 = vcmask 261312
        %1083 = vst.msk [vmem:[#allocation2] sm:$0xff] %vm1082, %v1080
        %v1084 = vld [vmem:[#allocation2] sm:$0xff]
        %v1085 = vld [vmem:[#allocation8] sm:$0xff]
        %v1086 = vld [vmem:[#allocation8 + $0x8] sm:$0xff]
        %v1087 = vld [vmem:[#allocation8 + $0x10] sm:$0xff]
        %v1088 = vld [vmem:[#allocation8 + $0x18] sm:$0xff]
        %v1089 = vld [vmem:[%s8] sm:$0x1]
        %v1091 = vperm.slane %v1089, 0
        %v1094 = vsel %vm715, %v1084, 0
        %1096 = vmatpush.msra.mxu0 0.0
        %1097 = vmatpush.msra.mxu0 0.0
        %1098 = vmatpush.msra.mxu0 0.0
        %1099 = vmatpush.msra.mxu0 0.0
        %1100 = vmatpush.msra.mxu0 0.0
        %1101 = vmatpush.msra.mxu0 0.0
        %1102 = vmatpush.msra.mxu0 0.0
        %1103 = vmatpush.msra.mxu0 0.0
        %1104 = vmatpush.msra.mxu0 0.0
        %1105 = vmatpush.msra.mxu0 0.0
        %1106 = vmatpush.msra.mxu0 0.0
        %1107 = vmatpush.msra.mxu0 0.0
        %1108 = vmatpush.msra.mxu0 %v1088
        %1109 = vmatpush.msra.mxu0 %v1087
        %1110 = vmatpush.msra.mxu0 %v1086
        %1111 = vmatpush.msra.mxu0 %v1085
        %1112 = vmatmul.f32.gmra.mxu0 %v1094
        %v1113 = vpop.f32.mrf.mxu0
        %v1114 = vadd.f32 %v1091, %v1113
        %1115 = vdwg.mxu0
        %v1116 = vadd.f32 %v695, %v1114
        %v1117 = vld [vmem:[%s9] sm:$0x1]
        %v1118 = vld [vmem:[%s10] sm:$0x1]
        %v1119 = vsel %vm715, %v1116, 0.0
        %1120 = vadd.xlane.f32.xlu0 %v1119
        %v1121 = vpop.xlane.xlu0 %1120
        %v1122 = vrcp.pop 32.0
        %v1123 = vmul.f32 32.0, %v1122
        %v1124 = vsub.f32 1.0, %v1123
        %v1125 = vmul.f32 %v1122, %v1124
        %v1126 = vadd.f32 %v1122, %v1125
        %vm1127 = vweird.f32 %v1122
        %v1128 = vsel %vm1127, %v1122, %v1126
        %v1129 = vmul.f32 %v1121, %v1128
        %v1130 = vsub.f32 %v1116, %v1129
        %v1131 = vmul.f32 %v1130, %v1130
        %v1132 = vsel %vm715, %v1131, 0.0
        %1133 = vadd.xlane.f32.xlu0 %v1132
        %v1134 = vpop.xlane.xlu0 %1133
        %v1135 = vmul.f32 %v1134, %v1128
        %v1136 = vadd.f32 %v1135, 1e-12
        %v1137 = vrsqrt.pop %v1136
        %v1138 = vmul.f32 %v1137, %v1136
        %v1139 = vmul.f32 %v1138, %v1137
        %v1140 = vmul.f32 0.5, %v1139
        %v1141 = vsub.f32 1.5, %v1140
        %v1142 = vmul.f32 %v1137, %v1141
        %vm1143 = vweird.f32 %v1136
        %vm1144 = vweird.f32 %v1137
        %vm1145 = vmor %vm1143, %vm1144
        %v1146 = vsel %vm1145, %v1137, %v1142
        %v1147 = vmul.f32 %v1130, %v1146
        %v1149 = vperm.slane %v1117, 0
        %v1151 = vmul.f32 %v1147, %v1149
        %v1153 = vperm.slane %v1118, 0
        %v1155 = vadd.f32 %v1151, %v1153
        %v1156 = vld [vmem:[#allocation10] sm:$0xff]
        %v1157 = vld [vmem:[#allocation10 + $0x8] sm:$0xff]
        %v1158 = vld [vmem:[#allocation10 + $0x10] sm:$0xff]
        %v1159 = vld [vmem:[#allocation10 + $0x18] sm:$0xff]
        %v1160 = vld [vmem:[%s12] sm:$0x1]
        %v1162 = vperm.slane %v1160, 0
        %v1165 = vsel %vm715, %v1155, 0
        %1167 = vmatpush.msra.mxu0 0.0
        %1168 = vmatpush.msra.mxu0 0.0
        %1169 = vmatpush.msra.mxu0 0.0
        %1170 = vmatpush.msra.mxu0 0.0
        %1171 = vmatpush.msra.mxu0 0.0
        %1172 = vmatpush.msra.mxu0 0.0
        %1173 = vmatpush.msra.mxu0 0.0
        %1174 = vmatpush.msra.mxu0 0.0
        %1175 = vmatpush.msra.mxu0 0.0
        %1176 = vmatpush.msra.mxu0 0.0
        %1177 = vmatpush.msra.mxu0 0.0
        %1178 = vmatpush.msra.mxu0 0.0
        %1179 = vmatpush.msra.mxu0 %v1159
        %1180 = vmatpush.msra.mxu0 %v1158
        %1181 = vmatpush.msra.mxu0 %v1157
        %1182 = vmatpush.msra.mxu0 %v1156
        %1183 = vmatmul.f32.gmra.mxu0 %v1165
        %v1184 = vpop.f32.mrf.mxu0
        %v1185 = vadd.f32 %v1162, %v1184
        %1186 = vdwg.mxu0
        %v1187 = vmul.f32 %v1185, 0.5
        %v1188 = vmul.f32 %v1185, 0.044715
        %v1189 = vmul.f32 %v1188, %v1185
        %v1190 = vmul.f32 %v1189, %v1185
        %v1191 = vadd.f32 %v1185, %v1190
        %v1192 = vmul.f32 %v1191, 0.7978846
        %v1193 = vtanh.pop %v1192
        %v1194 = vadd.f32 %v1193, 1.0
        %v1195 = vmul.f32 %v1187, %v1194
        %v1196 = vld [vmem:[%s13] sm:$0xff]
        %v1197 = vld [vmem:[%s13 + $0x8] sm:$0xff]
        %v1198 = vld [vmem:[%s13 + $0x10] sm:$0xff]
        %v1199 = vld [vmem:[%s13 + $0x18] sm:$0xff]
        %v1200 = vld [vmem:[%s13 + $0x20] sm:$0xff]
        %v1201 = vld [vmem:[%s13 + $0x28] sm:$0xff]
        %v1202 = vld [vmem:[%s13 + $0x30] sm:$0xff]
        %v1203 = vld [vmem:[%s13 + $0x38] sm:$0xff]
        %v1204 = vld [vmem:[%s14] sm:$0x1]
        %v1206 = vperm.slane %v1204, 0
        %vm1208 = vcmask 523264
        %v1210 = vsel %vm1208, %v1195, 0
        %1212 = vmatpush.msra.mxu0 0.0
        %1213 = vmatpush.msra.mxu0 0.0
        %1214 = vmatpush.msra.mxu0 0.0
        %1215 = vmatpush.msra.mxu0 0.0
        %1216 = vmatpush.msra.mxu0 0.0
        %1217 = vmatpush.msra.mxu0 0.0
        %1218 = vmatpush.msra.mxu0 0.0
        %1219 = vmatpush.msra.mxu0 0.0
        %1220 = vmatpush.msra.mxu0 %v1203
        %1221 = vmatpush.msra.mxu0 %v1202
        %1222 = vmatpush.msra.mxu0 %v1201
        %1223 = vmatpush.msra.mxu0 %v1200
        %1224 = vmatpush.msra.mxu0 %v1199
        %1225 = vmatpush.msra.mxu0 %v1198
        %1226 = vmatpush.msra.mxu0 %v1197
        %1227 = vmatpush.msra.mxu0 %v1196
        %1228 = vmatmul.f32.gmra.mxu0 %v1210
        %v1229 = vpop.f32.mrf.mxu0
        %v1230 = vadd.f32 %v1206, %v1229
        %1231 = vdwg.mxu0
        %v1232 = vadd.f32 %v1230, %v1155
        %v1233 = vld [vmem:[%s15] sm:$0x1]
        %v1234 = vld [vmem:[%s16] sm:$0x1]
        %v1235 = vsel %vm715, %v1232, 0.0
        %1236 = vadd.xlane.f32.xlu0 %v1235
        %v1237 = vpop.xlane.xlu0 %1236
        %v1238 = vmul.f32 %v1237, %v1128
        %v1239 = vsub.f32 %v1232, %v1238
        %v1240 = vmul.f32 %v1239, %v1239
        %v1241 = vsel %vm715, %v1240, 0.0
        %1242 = vadd.xlane.f32.xlu0 %v1241
        %v1243 = vpop.xlane.xlu0 %1242
        %v1244 = vmul.f32 %v1243, %v1128
        %v1245 = vadd.f32 %v1244, 1e-12
        %v1246 = vrsqrt.pop %v1245
        %v1247 = vmul.f32 %v1246, %v1245
        %v1248 = vmul.f32 %v1247, %v1246
        %v1249 = vmul.f32 0.5, %v1248
        %v1250 = vsub.f32 1.5, %v1249
        %v1251 = vmul.f32 %v1246, %v1250
        %vm1252 = vweird.f32 %v1245
        %vm1253 = vweird.f32 %v1246
        %vm1254 = vmor %vm1252, %vm1253
        %v1255 = vsel %vm1254, %v1246, %v1251
        %v1256 = vmul.f32 %v1239, %v1255
        %v1258 = vperm.slane %v1233, 0
        %v1260 = vmul.f32 %v1256, %v1258
        %v1262 = vperm.slane %v1234, 0
        %v1264 = vadd.f32 %v1260, %v1262
        %v1265 = vadd.f32 %v1264, %v695
        %v1266 = vld [vmem:[#allocation11] sm:$0xff]
        %v1267 = vld [vmem:[#allocation11 + $0x8] sm:$0xff]
        %v1268 = vld [vmem:[#allocation11 + $0x10] sm:$0xff]
        %v1269 = vld [vmem:[#allocation11 + $0x18] sm:$0xff]
        %v1270 = vld [vmem:[%s18] sm:$0x1]
        %v1272 = vperm.slane %v1270, 0
        %v1275 = vsel %vm715, %v1265, 0
        %1277 = vmatpush.msra.mxu0 0.0
        %1278 = vmatpush.msra.mxu0 0.0
        %1279 = vmatpush.msra.mxu0 0.0
        %1280 = vmatpush.msra.mxu0 0.0
        %1281 = vmatpush.msra.mxu0 0.0
        %1282 = vmatpush.msra.mxu0 0.0
        %1283 = vmatpush.msra.mxu0 0.0
        %1284 = vmatpush.msra.mxu0 0.0
        %1285 = vmatpush.msra.mxu0 0.0
        %1286 = vmatpush.msra.mxu0 0.0
        %1287 = vmatpush.msra.mxu0 0.0
        %1288 = vmatpush.msra.mxu0 0.0
        %1289 = vmatpush.msra.mxu0 %v1269
        %1290 = vmatpush.msra.mxu0 %v1268
        %1291 = vmatpush.msra.mxu0 %v1267
        %1292 = vmatpush.msra.mxu0 %v1266
        %1293 = vmatmul.f32.gmra.mxu0 %v1275
        %v1294 = vpop.f32.mrf.mxu0
        %v1295 = vadd.f32 %v1272, %v1294
        %1296 = vdwg.mxu0
        %1297 = vst [vmem:[%s681] sm:$0xff] %v1295
        %s1298 = sand.u32 %s456, 1
        %s1299 = scalar_lea.sflag [#allocation7], %s1298
        %s1300 = sand.u32 %s456, 1
        %s1301 = smul.addr %s1300, 8
        %s1302 = scalar_lea.vmem [#allocation13], %s1301
        // Predicated region
        $region109: #{tpu_custom_call.1} parent=91 // pred_check
          %p1303 = pneg %p466
        $region110: #{tpu_custom_call.1} parent=91 // pred_check_branch
          %1305 = sbr.rel (%p1303) target = $region112
        $region111: #{tpu_custom_call.1} parent=91 // pred_region
          %1307 = vsyncadd %s1299, 0
          %s1308 = smul.addr %s48, 2
          %s1309 = sadd.s32 %s49, %s1308
          %s1310 = smul.addr %s1309, 8
          %s1311 = scalar_lea.hbm %s19, %s1310
          %s1313 = sshll.u32 %s1302, 4
          %s1314 = int_to_ptr.vmem [resolvable:$true] %s1313
          %s1315 = sshll.u32 %s1311, 4
          %s1316 = int_to_ptr.hbm [resolvable:$true] %s1315
          %1318 = dma.vmem_to_hbm [thread:$0]  %s1314, 128, %s1316, %s1299
        $region112: #{tpu_custom_call.1} parent=91 // pred_fallthru
          _
      $region92: #{tpu_custom_call.1} parent=5 // pred_fallthru
        _
      %p1319 = scmp.le.s32.totalorder 2, %s39
      // Predicated region
      $region113: #{tpu_custom_call.1} parent=5 // pred_check
        %p1320 = pneg %p1319
      $region114: #{tpu_custom_call.1} parent=5 // pred_check_branch
        %1322 = sbr.rel (%p1320) target = $region116
      $region115: #{tpu_custom_call.1} parent=5 // pred_region
        %s1323 = ssub.s32 %s39, 2
        // Predicated region
        $region117: #{tpu_custom_call.1} parent=115 // pred_check
          %p1324 = pneg %p472
        $region118: #{tpu_custom_call.1} parent=115 // pred_check_branch
          %1326 = sbr.rel (%p1324) target = $region120
        $region119: #{tpu_custom_call.1} parent=115 // pred_region
          %s1327 = sand.u32 %s457, 1
          %s1328 = scalar_lea.sflag [#allocation7], %s1327
          %s1329 = sand.u32 %s457, 1
          %s1330 = smul.addr %s1329, 8
          %s1331 = scalar_lea.vmem [#allocation13], %s1330
          %1333 = dma.done %s1328, 128
        $region120: #{tpu_custom_call.1} parent=115 // pred_fallthru
          _
      $region116: #{tpu_custom_call.1} parent=5 // pred_fallthru
        _
    $region6: #{tpu_custom_call.1} parent=1 // loop_footer
      %s43 = sadd.s32 1, %s39
    $region7: #{tpu_custom_call.1} parent=1 // loop_footer_branch
      %38 = sbr.rel target = $region3
    $region8: #{tpu_custom_call.1} parent=1 // loop_exit
      _
    %1334 = vsyncpa [#allocation6], 1
    %s1335 = scalar_lea.sflag [#allocation6], 1
    %1336 = vsyncpa %s1335, 1
    %1337 = vsyncpa [#allocation9], 1
    %1338 = vsyncpa [#allocation12], 1
    %1339 = vsyncpa [#allocation7], 1
    %s1340 = scalar_lea.sflag [#allocation7], 1
    %1341 = vsyncpa %s1340, 1

</llo_original>
